<compile_context>
chip_gen: v6e
topology: v6e:2x2x1
jax: 0.10.0
libtpu: 0.0.40
codegen_flags: <defaults>
</compile_context>

<pallas_src>
import numpy as np
import jax
import jax.numpy as jnp
from jax.experimental import pallas as pl
from jax.experimental.pallas import tpu as pltpu

# ----- label / LF definitions (mirrors pixelLabels enum + the 14 @labeling_function's) -----
ABSTAIN = -1
NOT_TEXT = 0
TEXT = 1

(F_CHULL, F_EDGES, F_PILLOW, F_DOCTR, F_TESS,
 F_CONTOUR, F_TITLE, F_HOLES, F_OBJECTS, F_SEG) = range(10)
NUM_FEATURES = 10
NUM_CLASSES = 2

# (feature_index, vote_if_feature_true, vote_if_feature_false)
LF_TABLE = (
    (F_CHULL,   NOT_TEXT, ABSTAIN),   # CHULL_PURE
    (F_CHULL,   TEXT,     ABSTAIN),   # CHULL_NOISE
    (F_EDGES,   TEXT,     ABSTAIN),   # SKIMAGE_EDGES
    (F_EDGES,   ABSTAIN,  NOT_TEXT),  # SKIMAGE_EDGES_REVERSE
    (F_PILLOW,  TEXT,     ABSTAIN),   # PILLOW_EDGES
    (F_PILLOW,  ABSTAIN,  NOT_TEXT),  # PILLOW_EDGES_REVERSE
    (F_DOCTR,   TEXT,     ABSTAIN),   # DOCTR
    (F_DOCTR,   TEXT,     ABSTAIN),   # DOCTR2 (intentionally duplicates DOCTR, as in the original)
    (F_TESS,    TEXT,     ABSTAIN),   # TESSERACT
    (F_CONTOUR, TEXT,     ABSTAIN),   # CONTOUR
    (F_TITLE,   TEXT,     ABSTAIN),   # CONTOUR_TITLE
    (F_HOLES,   NOT_TEXT, ABSTAIN),   # MASK_HOLES
    (F_OBJECTS, NOT_TEXT, ABSTAIN),   # MASK_OBJECTS
    (F_SEG,     TEXT,     ABSTAIN),   # SEGMENTATION
)
NUM_LFS = len(LF_TABLE)


# ---------------------------------------------------------------------------------
# Wrapper-side collapse of the 14 LFs into per-feature DIFFERENCE weights.
# For LF j with feature f, firing with vote TEXT adds (lq, lnq) to (s_text, s_not),
# vote NOT_TEXT adds (lnq, lq), ABSTAIN adds nothing.  Since the vote depends only on
# the binary feature value, the class-score difference is exactly
#   diff(px) = s_text(px) - s_not(px) = base_diff + sum_f feat_f(px) * w_diff[f]
# and  prob_text = sigmoid(diff),  prob_not = 1 - prob_text,  label = diff > 0.
# ---------------------------------------------------------------------------------
def lf_diff_params(quality, eps=1e-6):
    q = jnp.clip(jnp.asarray(quality, jnp.float32), eps, 1.0 - eps)
    lq, lnq = jnp.log(q), jnp.log1p(-q)

    def contrib(vote, j):
        if vote == TEXT:
            return lq[j], lnq[j]
        if vote == NOT_TEXT:
            return lnq[j], lq[j]
        return jnp.float32(0.0), jnp.float32(0.0)     # ABSTAIN

    w_diff = [jnp.float32(0.0)] * NUM_FEATURES
    base_diff = jnp.float32(0.0)
    for j, (fidx, v_true, v_false) in enumerate(LF_TABLE):
        t1, n1 = contrib(v_true, j)      # contribution when feature == 1
        t0, n0 = contrib(v_false, j)     # contribution when feature == 0
        base_diff = base_diff + (t0 - n0)
        w_diff[fidx] = w_diff[fidx] + ((t1 - n1) - (t0 - n0))

    # layout: [w_diff(10), base_diff]
    return jnp.stack(w_diff + [base_diff]).astype(jnp.float32)


# ---------------------------------------------------------------------------------
# Kernel: per-pixel LF voting (difference form) + sigmoid + sign.
# ---------------------------------------------------------------------------------
def textron_kernel(params_ref, packed_ref, prob_ref, labels_ref):
    """params_ref: (NUM_FEATURES + 1,) f32 in SMEM — [w_diff(10), base_diff]
    packed_ref: (TH, TW) int32 in VMEM — bit f holds feature plane f
    prob_ref:   (TH, TW) bf16 — P(TEXT); P(NOT_TEXT) = 1 - P(TEXT)
    labels_ref: (TH, TW) int8 — 1 = TEXT, 0 = NOT_TEXT (ties -> NOT_TEXT, like np.argmax)
    """
    packed = packed_ref[...]
    diff = jnp.full(packed.shape, params_ref[NUM_FEATURES], jnp.float32)

    # Unrolled at trace time over the 10 feature planes: one mask + select-add each
    # (no int->float convert, no multiply) — pure VPU work, VALU is the binding slot.
    for f in range(NUM_FEATURES):
        diff = diff + jnp.where((packed & (1 << f)) != 0,
                                params_ref[f], jnp.float32(0.0))

    # label = argmax over the 2 classes; ties (diff == 0) -> NOT_TEXT, like np.argmax.
    labels_ref[...] = (diff > 0.0).astype(labels_ref.dtype)

    # prob_text = sigmoid(diff); exp + approx reciprocal both run in the idle EUP slot.
    d = jnp.clip(diff, -60.0, 60.0)       # keep exp() finite for pathological qualities
    prob_ref[...] = pl.reciprocal(1.0 + jnp.exp(-d), approx=True).astype(prob_ref.dtype)


# ---------------------------------------------------------------------------------
# Wrapper
# ---------------------------------------------------------------------------------
def _round_up(x, m):
    return ((x + m - 1) // m) * m


# bytes per pixel resident in VMEM per grid step:
#   double-buffered I/O: 2 * (4 B packed int32 + 2 B bf16 prob + 1 B int8 labels) = 14
#   full-tile f32 temporaries (diff / select / exp intermediates)            ~= 12
_BYTES_PER_PIXEL = 2 * (4 + 2 + 1) + 12


def _vmem_sizes():
    """(tile budget, compiler vmem limit) derived from this chip's VMEM capacity."""
    try:
        cap = pltpu.get_tpu_info().vmem_capacity_bytes
    except Exception:  # pragma: no cover - conservative fallback
        cap = 64 * 1024 * 1024
    budget = min(cap // 4, 24 * 1024 * 1024)       # 16 MiB on v7x, 24 MiB on v5e/v6e
    limit = min(cap // 2, 48 * 1024 * 1024)        # 32 MiB on v7x, 48 MiB on v5e/v6e
    return int(budget), int(limit)


def _choose_tiles(h, w_pad, max_tile_h, vmem_budget_bytes, min_grid_steps):
    # W-tiling fallback: only triggers for extremely wide images where even 32 rows
    # at full width would not fit the budget.
    tile_w = w_pad
    while tile_w > 128 and 32 * tile_w * _BYTES_PER_PIXEL > vmem_budget_bytes:
        tile_w = _round_up(tile_w // 2, 128)

    fit = max(32, int(vmem_budget_bytes // (tile_w * _BYTES_PER_PIXEL)))
    # Cap tile_h so the grid has >= min_grid_steps steps: keeps both v7x TensorCores
    # busy ("parallel" axis) and the DMA pipeline primed; costs nothing on v5e/v6e.
    cap = max(32, _round_up(pl.cdiv(h, min_grid_steps), 32))
    tile_h = min(max_tile_h, fit, cap, _round_up(h, 32))
    tile_h = max(32, (tile_h // 32) * 32)           # multiple of 32 (int8/bf16 friendly)
    return tile_h, tile_w


def textron_label_map(features, quality, *, max_tile_h=512, min_grid_steps=4):
    """features: (NUM_FEATURES, H, W) int/bool, values in {0, 1}
    quality:  (NUM_LFS,) float in (0, 1)  (QUALITY_GUIDE stand-in)
    Returns (prob_text (H, W) bfloat16, labels (H, W) int8).
    P(NOT_TEXT) = 1 - prob_text (reconstruct in the consumer if needed)."""
    f, h, w = features.shape
    assert f == NUM_FEATURES

    vmem_budget, vmem_limit = _vmem_sizes()
    w_pad = _round_up(w, 128)
    tile_h, tile_w = _choose_tiles(h, w_pad, max_tile_h, vmem_budget, min_grid_steps)
    w_pad = _round_up(w_pad, tile_w)
    h_pad = _round_up(h, tile_h)

    # TODO(synk): feature extraction (cv2/skimage/PIL/Tesseract/doctr inference), the
    # CAGE EM training loop, file I/O and get_bboxes() postprocess have no Pallas
    # equivalent; ideally the feature producer emits this packed bitmask directly —
    # packing here is a tiny XLA prologue.  Pack the UNPADDED planes first, then pad
    # the single 4 B/px plane (avoids materializing a padded 40 B/px tensor).
    bits = (features != 0).astype(jnp.int32)                               # (10, H, W)
    shifts = jnp.arange(NUM_FEATURES, dtype=jnp.int32).reshape(NUM_FEATURES, 1, 1)
    packed = jnp.sum(bits << shifts, axis=0).astype(jnp.int32)             # (H, W)
    packed = jnp.pad(packed, ((0, h_pad - h), (0, w_pad - w)))             # (h_pad, w_pad)

    params = lf_diff_params(quality)

    grid = (h_pad // tile_h, w_pad // tile_w)
    prob_text, labels = pl.pallas_call(
        textron_kernel,
        out_shape=(
            jax.ShapeDtypeStruct((h_pad, w_pad), jnp.bfloat16),
            jax.ShapeDtypeStruct((h_pad, w_pad), jnp.int8),
        ),
        grid_spec=pltpu.PrefetchScalarGridSpec(
            num_scalar_prefetch=0,
            grid=grid,
            in_specs=[
                pl.BlockSpec(memory_space=pltpu.SMEM),                      # diff params
                pl.BlockSpec((tile_h, tile_w), lambda i, j: (i, j)),        # packed features
            ],
            out_specs=[
                pl.BlockSpec((tile_h, tile_w), lambda i, j: (i, j)),        # prob_text
                pl.BlockSpec((tile_h, tile_w), lambda i, j: (i, j)),        # labels
            ],
        ),
        compiler_params=pltpu.CompilerParams(
            dimension_semantics=("parallel", "parallel"),
            vmem_limit_bytes=vmem_limit,
        ),
    )(params, packed)
    return prob_text[:h, :w], labels[:h, :w]


# ----- pure numpy reference (original 14-LF formulation) for correctness -----
def textron_ref(features, quality):
    features = np.asarray(features)
    quality = np.clip(np.asarray(quality, np.float64), 1e-6, 1.0 - 1e-6)
    _, h, w = features.shape
    lq, lnq = np.log(quality), np.log1p(-quality)
    s_text = np.zeros((h, w))
    s_not = np.zeros((h, w))
    for j, (fidx, v_true, v_false) in enumerate(LF_TABLE):
        vote = np.where(features[fidx] != 0, v_true, v_false)
        fires = vote != ABSTAIN
        s_text += np.where(fires, np.where(vote == TEXT, lq[j], lnq[j]), 0.0)
        s_not += np.where(fires, np.where(vote == NOT_TEXT, lq[j], lnq[j]), 0.0)
    m = np.maximum(s_text, s_not)
    e_t, e_n = np.exp(s_text - m), np.exp(s_not - m)
    probs = np.stack([e_n, e_t]) / (e_t + e_n)
    labels = np.argmax(probs, axis=0)
    return probs.astype(np.float32), labels.astype(np.int32)


if __name__ == "__main__":
    key = jax.random.PRNGKey(0)
    H, W = 200, 272                      # non-aligned on purpose: exercises padding + multi-step grid
    features = jax.random.bernoulli(
        key, p=0.4, shape=(NUM_FEATURES, H, W)).astype(jnp.int8)

    # Deterministic per-LF quality guide (stand-in for QUALITY_GUIDE).
    quality = jnp.asarray(0.70 + 0.015 * np.arange(NUM_LFS), dtype=jnp.float32)

    prob_text, labels = textron_label_map(features, quality)
    prob_text = jax.block_until_ready(prob_text)
    labels = jax.block_until_ready(labels)

    # Reconstruct the 2-class probability stack (consumer-side, trivial epilogue).
    p_t = np.asarray(prob_text).astype(np.float32)
    probs = np.stack([1.0 - p_t, p_t])

    probs_ref, labels_ref = textron_ref(np.asarray(features), np.asarray(quality))
    np.testing.assert_allclose(probs, probs_ref, atol=1e-2, rtol=1e-2)   # bf16 tolerance
    np.testing.assert_array_equal(np.asarray(labels).astype(np.int32), labels_ref)

    print("KERNEL_OK")
</pallas_src>

<mosaic_0001>
module attributes {stable_mosaic.version = 11 : i64} {
  func.func @textron_kernel(%arg0: i32, %arg1: i32, %arg2: memref<11xf32, #tpu.memory_space<smem>>, %arg3: memref<64x384xi32, #tpu.memory_space<vmem>>, %arg4: memref<64x384xbf16, #tpu.memory_space<vmem>>, %arg5: memref<64x384xi8, #tpu.memory_space<vmem>>) attributes {dimension_semantics = [#tpu.dimension_semantics<parallel>, #tpu.dimension_semantics<parallel>], iteration_bounds = array<i64: 4, 1>, scalar_prefetch = 0 : i64, scratch_operands = 0 : i64, tpu.core_type = #tpu.core_type<tc>, window_params = [{transform_indices = @transform_0, window_bounds = array<i64: 11>}, {transform_indices = @transform_1, window_bounds = array<i64: 64, 384>}, {transform_indices = @transform_2, window_bounds = array<i64: 64, 384>}, {transform_indices = @transform_3, window_bounds = array<i64: 64, 384>}]} {
    %c0 = arith.constant 0 : index
    %c0_0 = arith.constant 0 : index
    %0 = vector.load %arg3[%c0, %c0_0] : memref<64x384xi32, #tpu.memory_space<vmem>>, vector<64x384xi32>
    %c10 = arith.constant 10 : index
    %1 = memref.load %arg2[%c10] : memref<11xf32, #tpu.memory_space<smem>>
    %2 = vector.broadcast %1 : f32 to vector<64x384xf32>
    %c1_i32 = arith.constant 1 : i32
    %3 = vector.broadcast %c1_i32 : i32 to vector<64x384xi32>
    %4 = arith.andi %0, %3 : vector<64x384xi32>
    %c0_i32 = arith.constant 0 : i32
    %5 = vector.broadcast %c0_i32 : i32 to vector<64x384xi32>
    %6 = arith.cmpi ne, %4, %5 : vector<64x384xi32>
    %c0_1 = arith.constant 0 : index
    %7 = memref.load %arg2[%c0_1] : memref<11xf32, #tpu.memory_space<smem>>
    %cst = arith.constant 0.000000e+00 : f32
    %8 = vector.broadcast %7 : f32 to vector<64x384xf32>
    %9 = vector.broadcast %cst : f32 to vector<64x384xf32>
    %10 = arith.select %6, %8, %9 : vector<64x384xi1>, vector<64x384xf32>
    %11 = arith.addf %2, %10 : vector<64x384xf32>
    %c2_i32 = arith.constant 2 : i32
    %12 = vector.broadcast %c2_i32 : i32 to vector<64x384xi32>
    %13 = arith.andi %0, %12 : vector<64x384xi32>
    %c0_i32_2 = arith.constant 0 : i32
    %14 = vector.broadcast %c0_i32_2 : i32 to vector<64x384xi32>
    %15 = arith.cmpi ne, %13, %14 : vector<64x384xi32>
    %c1 = arith.constant 1 : index
    %16 = memref.load %arg2[%c1] : memref<11xf32, #tpu.memory_space<smem>>
    %cst_3 = arith.constant 0.000000e+00 : f32
    %17 = vector.broadcast %16 : f32 to vector<64x384xf32>
    %18 = vector.broadcast %cst_3 : f32 to vector<64x384xf32>
    %19 = arith.select %15, %17, %18 : vector<64x384xi1>, vector<64x384xf32>
    %20 = arith.addf %11, %19 : vector<64x384xf32>
    %c4_i32 = arith.constant 4 : i32
    %21 = vector.broadcast %c4_i32 : i32 to vector<64x384xi32>
    %22 = arith.andi %0, %21 : vector<64x384xi32>
    %c0_i32_4 = arith.constant 0 : i32
    %23 = vector.broadcast %c0_i32_4 : i32 to vector<64x384xi32>
    %24 = arith.cmpi ne, %22, %23 : vector<64x384xi32>
    %c2 = arith.constant 2 : index
    %25 = memref.load %arg2[%c2] : memref<11xf32, #tpu.memory_space<smem>>
    %cst_5 = arith.constant 0.000000e+00 : f32
    %26 = vector.broadcast %25 : f32 to vector<64x384xf32>
    %27 = vector.broadcast %cst_5 : f32 to vector<64x384xf32>
    %28 = arith.select %24, %26, %27 : vector<64x384xi1>, vector<64x384xf32>
    %29 = arith.addf %20, %28 : vector<64x384xf32>
    %c8_i32 = arith.constant 8 : i32
    %30 = vector.broadcast %c8_i32 : i32 to vector<64x384xi32>
    %31 = arith.andi %0, %30 : vector<64x384xi32>
    %c0_i32_6 = arith.constant 0 : i32
    %32 = vector.broadcast %c0_i32_6 : i32 to vector<64x384xi32>
    %33 = arith.cmpi ne, %31, %32 : vector<64x384xi32>
    %c3 = arith.constant 3 : index
    %34 = memref.load %arg2[%c3] : memref<11xf32, #tpu.memory_space<smem>>
    %cst_7 = arith.constant 0.000000e+00 : f32
    %35 = vector.broadcast %34 : f32 to vector<64x384xf32>
    %36 = vector.broadcast %cst_7 : f32 to vector<64x384xf32>
    %37 = arith.select %33, %35, %36 : vector<64x384xi1>, vector<64x384xf32>
    %38 = arith.addf %29, %37 : vector<64x384xf32>
    %c16_i32 = arith.constant 16 : i32
    %39 = vector.broadcast %c16_i32 : i32 to vector<64x384xi32>
    %40 = arith.andi %0, %39 : vector<64x384xi32>
    %c0_i32_8 = arith.constant 0 : i32
    %41 = vector.broadcast %c0_i32_8 : i32 to vector<64x384xi32>
    %42 = arith.cmpi ne, %40, %41 : vector<64x384xi32>
    %c4 = arith.constant 4 : index
    %43 = memref.load %arg2[%c4] : memref<11xf32, #tpu.memory_space<smem>>
    %cst_9 = arith.constant 0.000000e+00 : f32
    %44 = vector.broadcast %43 : f32 to vector<64x384xf32>
    %45 = vector.broadcast %cst_9 : f32 to vector<64x384xf32>
    %46 = arith.select %42, %44, %45 : vector<64x384xi1>, vector<64x384xf32>
    %47 = arith.addf %38, %46 : vector<64x384xf32>
    %c32_i32 = arith.constant 32 : i32
    %48 = vector.broadcast %c32_i32 : i32 to vector<64x384xi32>
    %49 = arith.andi %0, %48 : vector<64x384xi32>
    %c0_i32_10 = arith.constant 0 : i32
    %50 = vector.broadcast %c0_i32_10 : i32 to vector<64x384xi32>
    %51 = arith.cmpi ne, %49, %50 : vector<64x384xi32>
    %c5 = arith.constant 5 : index
    %52 = memref.load %arg2[%c5] : memref<11xf32, #tpu.memory_space<smem>>
    %cst_11 = arith.constant 0.000000e+00 : f32
    %53 = vector.broadcast %52 : f32 to vector<64x384xf32>
    %54 = vector.broadcast %cst_11 : f32 to vector<64x384xf32>
    %55 = arith.select %51, %53, %54 : vector<64x384xi1>, vector<64x384xf32>
    %56 = arith.addf %47, %55 : vector<64x384xf32>
    %c64_i32 = arith.constant 64 : i32
    %57 = vector.broadcast %c64_i32 : i32 to vector<64x384xi32>
    %58 = arith.andi %0, %57 : vector<64x384xi32>
    %c0_i32_12 = arith.constant 0 : i32
    %59 = vector.broadcast %c0_i32_12 : i32 to vector<64x384xi32>
    %60 = arith.cmpi ne, %58, %59 : vector<64x384xi32>
    %c6 = arith.constant 6 : index
    %61 = memref.load %arg2[%c6] : memref<11xf32, #tpu.memory_space<smem>>
    %cst_13 = arith.constant 0.000000e+00 : f32
    %62 = vector.broadcast %61 : f32 to vector<64x384xf32>
    %63 = vector.broadcast %cst_13 : f32 to vector<64x384xf32>
    %64 = arith.select %60, %62, %63 : vector<64x384xi1>, vector<64x384xf32>
    %65 = arith.addf %56, %64 : vector<64x384xf32>
    %c128_i32 = arith.constant 128 : i32
    %66 = vector.broadcast %c128_i32 : i32 to vector<64x384xi32>
    %67 = arith.andi %0, %66 : vector<64x384xi32>
    %c0_i32_14 = arith.constant 0 : i32
    %68 = vector.broadcast %c0_i32_14 : i32 to vector<64x384xi32>
    %69 = arith.cmpi ne, %67, %68 : vector<64x384xi32>
    %c7 = arith.constant 7 : index
    %70 = memref.load %arg2[%c7] : memref<11xf32, #tpu.memory_space<smem>>
    %cst_15 = arith.constant 0.000000e+00 : f32
    %71 = vector.broadcast %70 : f32 to vector<64x384xf32>
    %72 = vector.broadcast %cst_15 : f32 to vector<64x384xf32>
    %73 = arith.select %69, %71, %72 : vector<64x384xi1>, vector<64x384xf32>
    %74 = arith.addf %65, %73 : vector<64x384xf32>
    %c256_i32 = arith.constant 256 : i32
    %75 = vector.broadcast %c256_i32 : i32 to vector<64x384xi32>
    %76 = arith.andi %0, %75 : vector<64x384xi32>
    %c0_i32_16 = arith.constant 0 : i32
    %77 = vector.broadcast %c0_i32_16 : i32 to vector<64x384xi32>
    %78 = arith.cmpi ne, %76, %77 : vector<64x384xi32>
    %c8 = arith.constant 8 : index
    %79 = memref.load %arg2[%c8] : memref<11xf32, #tpu.memory_space<smem>>
    %cst_17 = arith.constant 0.000000e+00 : f32
    %80 = vector.broadcast %79 : f32 to vector<64x384xf32>
    %81 = vector.broadcast %cst_17 : f32 to vector<64x384xf32>
    %82 = arith.select %78, %80, %81 : vector<64x384xi1>, vector<64x384xf32>
    %83 = arith.addf %74, %82 : vector<64x384xf32>
    %c512_i32 = arith.constant 512 : i32
    %84 = vector.broadcast %c512_i32 : i32 to vector<64x384xi32>
    %85 = arith.andi %0, %84 : vector<64x384xi32>
    %c0_i32_18 = arith.constant 0 : i32
    %86 = vector.broadcast %c0_i32_18 : i32 to vector<64x384xi32>
    %87 = arith.cmpi ne, %85, %86 : vector<64x384xi32>
    %c9 = arith.constant 9 : index
    %88 = memref.load %arg2[%c9] : memref<11xf32, #tpu.memory_space<smem>>
    %cst_19 = arith.constant 0.000000e+00 : f32
    %89 = vector.broadcast %88 : f32 to vector<64x384xf32>
    %90 = vector.broadcast %cst_19 : f32 to vector<64x384xf32>
    %91 = arith.select %87, %89, %90 : vector<64x384xi1>, vector<64x384xf32>
    %92 = arith.addf %83, %91 : vector<64x384xf32>
    %cst_20 = arith.constant 0.000000e+00 : f32
    %93 = vector.broadcast %cst_20 : f32 to vector<64x384xf32>
    %94 = arith.cmpf ogt, %92, %93 : vector<64x384xf32>
    %95 = arith.extui %94 : vector<64x384xi1> to vector<64x384xi8>
    %c0_21 = arith.constant 0 : index
    %c0_22 = arith.constant 0 : index
    %96 = vector.load %arg5[%c0_21, %c0_22] : memref<64x384xi8, #tpu.memory_space<vmem>>, vector<64x384xi8>
    tpu.vector_store %arg5[%c0_21, %c0_22], %95 {strides = array<i32>} : memref<64x384xi8, #tpu.memory_space<vmem>>, vector<64x384xi8>,
    %cst_23 = arith.constant -6.000000e+01 : f32
    %cst_24 = arith.constant 6.000000e+01 : f32
    %97 = vector.broadcast %cst_23 : f32 to vector<64x384xf32>
    %98 = arith.maximumf %97, %92 : vector<64x384xf32>
    %99 = vector.broadcast %cst_24 : f32 to vector<64x384xf32>
    %100 = arith.minimumf %99, %98 : vector<64x384xf32>
    %cst_25 = arith.constant 0.000000e+00 : f32
    %101 = vector.broadcast %cst_25 : f32 to vector<64x384xf32>
    %102 = arith.subf %101, %100 : vector<64x384xf32>
    %103 = math.exp %102 : vector<64x384xf32>
    %cst_26 = arith.constant 1.000000e+00 : f32
    %104 = vector.broadcast %cst_26 : f32 to vector<64x384xf32>
    %105 = arith.addf %104, %103 : vector<64x384xf32>
    %106 = tpu.reciprocal %105 {approx = true} : vector<64x384xf32> -> vector<64x384xf32>
    %107 = arith.truncf %106 : vector<64x384xf32> to vector<64x384xbf16>
    %c0_27 = arith.constant 0 : index
    %c0_28 = arith.constant 0 : index
    %108 = vector.load %arg4[%c0_27, %c0_28] : memref<64x384xbf16, #tpu.memory_space<vmem>>, vector<64x384xbf16>
    tpu.vector_store %arg4[%c0_27, %c0_28], %107 {strides = array<i32>} : memref<64x384xbf16, #tpu.memory_space<vmem>>, vector<64x384xbf16>,
    return
  }
  func.func @transform_0(%arg0: i32, %arg1: i32) -> i32 {
    %c0_i32 = arith.constant 0 : i32
    %c0_i32_0 = arith.constant 0 : i32
    return %c0_i32 : i32
  }
  func.func @transform_1(%arg0: i32, %arg1: i32) -> (i32, i32) {
    %c0_i32 = arith.constant 0 : i32
    return %arg0, %arg1 : i32, i32
  }
  func.func @transform_2(%arg0: i32, %arg1: i32) -> (i32, i32) {
    %c0_i32 = arith.constant 0 : i32
    return %arg0, %arg1 : i32, i32
  }
  func.func @transform_3(%arg0: i32, %arg1: i32) -> (i32, i32) {
    %c0_i32 = arith.constant 0 : i32
    return %arg0, %arg1 : i32, i32
  }
}

</mosaic_0001>

<llo_original>
// kernel: tpu_custom_call.1
$region0: #{tpu_custom_call.1}
  #allocation0 [shape = 'u32[]', space=smem, size = 0x4, offset = 0x4, fixed_abs, tag = 'smem constant byte address 0x4 - core index']
  #allocation1 [shape = 'u32[144,128]{1,0:T(1,128)}', space=vmem, size = 0x12000, scoped, tag = 'internal scratch']
  %s0 = inlined_call_operand.hbm [shape: f32[11], index: 0, kind: input, shape index: {}]
  %s1 = inlined_call_operand.hbm [shape: s32[256,384], index: 1, kind: input, shape index: {}]
  %s2 = inlined_call_operand.hbm [shape: bf16[256,384], index: 2, kind: output, shape index: {0}]
  %s3 = inlined_call_operand.hbm [shape: s8[256,384], index: 3, kind: output, shape index: {1}]
  %4 = xla_tuple %s2, %s3
  %s5 = sld [smem:[#allocation0]]
  $region57: #{tpu_custom_call.1} parent=0
    _
  %s7 = ssub.s32 1, %s5
  %s8 = scalar_select 0, %s7, %s5
  $region1: #{tpu_custom_call.1} parent=0
    #allocation2 [shape = 'u8[512]{0}', space=smem, size = 0x200, scoped, tag = 'input window, operand 0, single buffered']
    #allocation3 [shape = 's32[2]{0}', space=sflag, size = 0x8, scoped, tag = 'scoped memory for tpu_custom_call.1']
    #allocation4 [shape = 's32[2]{0}', space=sflag, size = 0x8, scoped, tag = 'scoped memory for tpu_custom_call.1']
    #allocation5 [shape = 's32[2]{0}', space=sflag, size = 0x8, scoped, tag = 'scoped memory for tpu_custom_call.1']
    #allocation6 [shape = 'u8[196608]{0}', space=vmem, size = 0x30000, scoped, tag = 'input window, operand 1']
    #allocation7 [shape = 'u8[98304]{0}', space=vmem, size = 0x18000, scoped, tag = 'output window, operand 0']
    #allocation8 [shape = 'u8[49152]{0}', space=vmem, size = 0xc000, scoped, tag = 'output window, operand 1']
    #allocation9 [shape = 's32[2]{0}', space=sflag, size = 0x8, scoped, tag = 'scoped memory for tpu_custom_call.1']
    %9 = vsyncpa [#allocation5], 0
    %10 = vsyncpa [#allocation3], 0
    %s11 = scalar_lea.sflag [#allocation3], 1
    %12 = vsyncpa %s11, 0
    %13 = vsyncpa [#allocation4], 0
    %s14 = scalar_lea.sflag [#allocation4], 1
    %15 = vsyncpa %s14, 0
    %16 = vsyncpa [#allocation9], 0
    %s17 = scalar_lea.sflag [#allocation9], 1
    %18 = vsyncpa %s17, 0
    loop: start=0, step=1, limit=6
    $region2: #{tpu_custom_call.1} parent=1 // loop_pre_header
      _
    $region3: #{tpu_custom_call.1} parent=1 // loop_header
      %s20 = sphi 0, %s24
      %p21 = scmp.ge.s32.totalorder %s20, 6
      %s27 = sphi 0, %s39
      %s28 = sphi 0, %s35
      %s29 = sphi 0, %s27
      %s30 = sphi 0, %s28
      %s31 = sphi 0, %s29
      %s32 = sphi 0, %s30
      %s40 = sphi 0, %s40
      %s42 = sphi 0, %s40
      %s43 = sphi 0, %s42
      %s57 = sphi 0, %s43
      %s65 = sphi 0, %s67
      %s68 = sphi 0, %s65
      %s69 = sphi 0, %s68
      %s85 = sphi 0, %s69
      %s93 = sphi 0, %s95
      %s96 = sphi 0, %s93
      %s97 = sphi 0, %s96
      %s113 = sphi 0, %s97
      %s121 = sphi 0, %s123
      %s124 = sphi 0, %s121
      %s125 = sphi 0, %s124
      %s141 = sphi 0, %s125
    $region4: #{tpu_custom_call.1} parent=1 // loop_header_branch
      %23 = sbr.rel (%p21) target = $region8
    $region5: #{tpu_custom_call.1} parent=1 // loop_body
      %s25 = ssub.s32 %s20, 1
      %s26 = ssub.s32 %s20, 2
      %s33 = sadd.s32 1, %s28
      %p34 = scmp.ge.s32.totalorder %s33, 1
      %s35 = scalar_select %p34, 0, %s33
      %s36 = sadd.s32 1, %s27
      %s37 = scalar_select %p34, %s36, %s27
      %p38 = scmp.ge.s32.totalorder %s37, 4
      %s39 = scalar_select %p38, 0, %s37
      %s41 = sadd.s32 %s40, 1
      %p44 = scmp.eq.s32.totalorder %s20, 3
      %p45 = scmp.ne.s32.totalorder %s40, %s42
      %p46 = scmp.eq.s32.totalorder %s20, 0
      %p47 = por %p45, %p46
      %p48 = scmp.ne.s32.totalorder %s40, %s42
      %p49 = scmp.eq.s32.totalorder %s25, 3
      %p50 = por %p48, %p49
      %p51 = scmp.ne.s32.totalorder %s42, %s43
      %p52 = scmp.eq.s32.totalorder %s25, 0
      %p53 = por %p51, %p52
      %p54 = scmp.ne.s32.totalorder %s42, %s43
      %p55 = scmp.eq.s32.totalorder %s26, 3
      %p56 = por %p54, %p55
      %p58 = scmp.ne.s32.totalorder %s43, %s57
      %p59 = scmp.eq.s32.totalorder %s26, 0
      %p60 = por %p58, %p59
      %s61 = ssub.s32 %s27, %s39
      %s62 = ssub.s32 %s28, %s35
      %s63 = sor.u32 %s61, %s62
      %p64 = scmp.eq.s32.totalorder %s63, 0
      %s66 = sadd.s32 %s65, 1
      %s67 = scalar_select %p64, %s65, %s66
      %p70 = pneg %p64
      %p71 = scmp.eq.s32.totalorder %s20, 3
      %p72 = por %p70, %p71
      %p73 = scmp.ne.s32.totalorder %s65, %s68
      %p74 = scmp.eq.s32.totalorder %s20, 0
      %p75 = por %p73, %p74
      %p76 = scmp.ne.s32.totalorder %s65, %s68
      %p77 = scmp.eq.s32.totalorder %s25, 3
      %p78 = por %p76, %p77
      %p79 = scmp.ne.s32.totalorder %s68, %s69
      %p80 = scmp.eq.s32.totalorder %s25, 0
      %p81 = por %p79, %p80
      %p82 = scmp.ne.s32.totalorder %s68, %s69
      %p83 = scmp.eq.s32.totalorder %s26, 3
      %p84 = por %p82, %p83
      %p86 = scmp.ne.s32.totalorder %s69, %s85
      %p87 = scmp.eq.s32.totalorder %s26, 0
      %p88 = por %p86, %p87
      %s89 = ssub.s32 %s27, %s39
      %s90 = ssub.s32 %s28, %s35
      %s91 = sor.u32 %s89, %s90
      %p92 = scmp.eq.s32.totalorder %s91, 0
      %s94 = sadd.s32 %s93, 1
      %s95 = scalar_select %p92, %s93, %s94
      %p98 = pneg %p92
      %p99 = scmp.eq.s32.totalorder %s20, 3
      %p100 = por %p98, %p99
      %p101 = scmp.ne.s32.totalorder %s93, %s96
      %p102 = scmp.eq.s32.totalorder %s20, 0
      %p103 = por %p101, %p102
      %p104 = scmp.ne.s32.totalorder %s93, %s96
      %p105 = scmp.eq.s32.totalorder %s25, 3
      %p106 = por %p104, %p105
      %p107 = scmp.ne.s32.totalorder %s96, %s97
      %p108 = scmp.eq.s32.totalorder %s25, 0
      %p109 = por %p107, %p108
      %p110 = scmp.ne.s32.totalorder %s96, %s97
      %p111 = scmp.eq.s32.totalorder %s26, 3
      %p112 = por %p110, %p111
      %p114 = scmp.ne.s32.totalorder %s97, %s113
      %p115 = scmp.eq.s32.totalorder %s26, 0
      %p116 = por %p114, %p115
      %s117 = ssub.s32 %s27, %s39
      %s118 = ssub.s32 %s28, %s35
      %s119 = sor.u32 %s117, %s118
      %p120 = scmp.eq.s32.totalorder %s119, 0
      %s122 = sadd.s32 %s121, 1
      %s123 = scalar_select %p120, %s121, %s122
      %p126 = pneg %p120
      %p127 = scmp.eq.s32.totalorder %s20, 3
      %p128 = por %p126, %p127
      %p129 = scmp.ne.s32.totalorder %s121, %s124
      %p130 = scmp.eq.s32.totalorder %s20, 0
      %p131 = por %p129, %p130
      %p132 = scmp.ne.s32.totalorder %s121, %s124
      %p133 = scmp.eq.s32.totalorder %s25, 3
      %p134 = por %p132, %p133
      %p135 = scmp.ne.s32.totalorder %s124, %s125
      %p136 = scmp.eq.s32.totalorder %s25, 0
      %p137 = por %p135, %p136
      %p138 = scmp.ne.s32.totalorder %s124, %s125
      %p139 = scmp.eq.s32.totalorder %s26, 3
      %p140 = por %p138, %p139
      %p142 = scmp.ne.s32.totalorder %s125, %s141
      %p143 = scmp.eq.s32.totalorder %s26, 0
      %p144 = por %p142, %p143
      %p145 = scmp.le.s32.totalorder 1, %s20
      %p146 = scmp.lt.s32.totalorder %s20, 5
      %p147 = pnand %p145, %p146
      %p148 = pneg %p147
      // Predicated region
      $region9: #{tpu_custom_call.1} parent=5 // pred_check
        _
      $region10: #{tpu_custom_call.1} parent=5 // pred_check_branch
        %150 = sbr.rel (%p147) target = $region12
      $region11: #{tpu_custom_call.1} parent=5 // pred_region
        %s151 = ssub.s32 %s20, 1
        // Predicated region
        $region13: #{tpu_custom_call.1} parent=11 // pred_check
          %p152 = pneg %p53
        $region14: #{tpu_custom_call.1} parent=11 // pred_check_branch
          %154 = sbr.rel (%p152) target = $region16
        $region15: #{tpu_custom_call.1} parent=11 // pred_region
          %s156 = ssub.s32 16, 16
          %157 = vsyncadd [#allocation5], %s156
          %160 = dma.hbm_to_smem %s0, 16, [#allocation2], [#allocation5]
        $region16: #{tpu_custom_call.1} parent=11 // pred_fallthru
          _
      $region12: #{tpu_custom_call.1} parent=5 // pred_fallthru
        _
      %p161 = scmp.lt.s32.totalorder %s20, 4
      // Predicated region
      $region17: #{tpu_custom_call.1} parent=5 // pred_check
        %p162 = pneg %p161
      $region18: #{tpu_custom_call.1} parent=5 // pred_check_branch
        %164 = sbr.rel (%p162) target = $region20
      $region19: #{tpu_custom_call.1} parent=5 // pred_region
        // Predicated region
        $region21: #{tpu_custom_call.1} parent=19 // pred_check
          %p165 = pneg %p75
        $region22: #{tpu_custom_call.1} parent=19 // pred_check_branch
          %167 = sbr.rel (%p165) target = $region24
        $region23: #{tpu_custom_call.1} parent=19 // pred_region
          %s168 = sand.u32 %s65, 1
          %s169 = scalar_lea.sflag [#allocation3], %s168
          %s170 = sand.u32 %s65, 1
          %s171 = smul.addr %s170, 192
          %s172 = scalar_lea.vmem [#allocation6], %s171
          %s173 = smul.u32 8, %s27
          %s174 = smul.u32 3, %s28
          %s176 = ssub.s32 3072, 3072
          %177 = vsyncadd %s169, %s176
          %s178 = smul.addr %s173, 3
          %s179 = sadd.s32 %s174, %s178
          %s180 = smul.addr %s179, 128
          %s181 = scalar_lea.hbm %s1, %s180
          %s182 = sshll.u32 %s172, 4
          %s183 = int_to_ptr.vmem [resolvable:$true] %s182
          %188 = dma.hbm_to_vmem [thread:$0]  %s181, 3072, %s183, %s169, 384, 384, 24
        $region24: #{tpu_custom_call.1} parent=19 // pred_fallthru
          _
      $region20: #{tpu_custom_call.1} parent=5 // pred_fallthru
        _
      %p189 = scmp.le.s32.totalorder 1, %s20
      %p190 = scmp.lt.s32.totalorder %s20, 5
      %p191 = pnand %p189, %p190
      %p192 = pneg %p191
      // Predicated region
      $region25: #{tpu_custom_call.1} parent=5 // pred_check
        _
      $region26: #{tpu_custom_call.1} parent=5 // pred_check_branch
        %194 = sbr.rel (%p191) target = $region28
      $region27: #{tpu_custom_call.1} parent=5 // pred_region
        %s195 = ssub.s32 %s20, 1
        // Predicated region
        $region29: #{tpu_custom_call.1} parent=27 // pred_check
          %p196 = pneg %p53
        $region30: #{tpu_custom_call.1} parent=27 // pred_check_branch
          %198 = sbr.rel (%p196) target = $region32
        $region31: #{tpu_custom_call.1} parent=27 // pred_region
          %199 = dma.done [#allocation5], 16
        $region32: #{tpu_custom_call.1} parent=27 // pred_fallthru
          _
        %s200 = sand.u32 %s68, 1
        %s201 = scalar_lea.sflag [#allocation3], %s200
        %s202 = sand.u32 %s68, 1
        %s203 = smul.addr %s202, 192
        %s204 = scalar_lea.vmem [#allocation6], %s203
        // Predicated region
        $region33: #{tpu_custom_call.1} parent=27 // pred_check
          %p205 = pneg %p81
        $region34: #{tpu_custom_call.1} parent=27 // pred_check_branch
          %207 = sbr.rel (%p205) target = $region36
        $region35: #{tpu_custom_call.1} parent=27 // pred_region
          %208 = dma.done %s201, 3072
        $region36: #{tpu_custom_call.1} parent=27 // pred_fallthru
          _
        %209 = sfence
        %p210 = pneg %p53
        %p211 = pneg %p50
        %s212 = sand.u32 %s68, 1
        %s213 = scalar_lea.sflag [#allocation3], %s212
        %s214 = sand.u32 %s68, 1
        %s215 = smul.addr %s214, 192
        %s216 = scalar_lea.vmem [#allocation6], %s215
        %p217 = pneg %p81
        %p218 = pneg %p78
        %p219 = pneg %p109
        %p220 = pneg %p106
        %s221 = sand.u32 %s96, 1
        %s222 = scalar_lea.sflag [#allocation4], %s221
        %s223 = sand.u32 %s96, 1
        %s224 = smul.addr %s223, 96
        %s225 = scalar_lea.vmem [#allocation7], %s224
        %p226 = pneg %p137
        %p227 = pneg %p134
        %s228 = sand.u32 %s124, 1
        %s229 = scalar_lea.sflag [#allocation9], %s228
        %s230 = sand.u32 %s124, 1
        %s231 = smul.addr %s230, 48
        %s232 = scalar_lea.vmem [#allocation8], %s231
        %s233 = smul.u32 8, %s29
        %s234 = smul.u32 3, %s30
        %s235 = smul.u32 8, %s29
        %s236 = smul.u32 3, %s30
        %s237 = smul.u32 2, %s29
        %s238 = smul.u32 3, %s30
        %v241 = vld [vmem:[%s204] sm:$0xff]
        %v242 = vld [vmem:[%s204 + $0x8] sm:$0xff]
        %v243 = vld [vmem:[%s204 + $0x10] sm:$0xff]
        %v244 = vld [vmem:[%s204 + $0x18] sm:$0xff]
        %v245 = vld [vmem:[%s204 + $0x20] sm:$0xff]
        %v246 = vld [vmem:[%s204 + $0x28] sm:$0xff]
        %v247 = vld [vmem:[%s204 + $0x30] sm:$0xff]
        %v248 = vld [vmem:[%s204 + $0x38] sm:$0xff]
        %v249 = vld [vmem:[%s204 + $0x40] sm:$0xff]
        %v250 = vld [vmem:[%s204 + $0x48] sm:$0xff]
        %v251 = vld [vmem:[%s204 + $0x50] sm:$0xff]
        %v252 = vld [vmem:[%s204 + $0x58] sm:$0xff]
        %v253 = vld [vmem:[%s204 + $0x60] sm:$0xff]
        %v254 = vld [vmem:[%s204 + $0x68] sm:$0xff]
        %v255 = vld [vmem:[%s204 + $0x70] sm:$0xff]
        %v256 = vld [vmem:[%s204 + $0x78] sm:$0xff]
        %v257 = vld [vmem:[%s204 + $0x80] sm:$0xff]
        %v258 = vld [vmem:[%s204 + $0x88] sm:$0xff]
        %v259 = vld [vmem:[%s204 + $0x90] sm:$0xff]
        %v260 = vld [vmem:[%s204 + $0x98] sm:$0xff]
        %v261 = vld [vmem:[%s204 + $0xa0] sm:$0xff]
        %v262 = vld [vmem:[%s204 + $0xa8] sm:$0xff]
        %v263 = vld [vmem:[%s204 + $0xb0] sm:$0xff]
        %v264 = vld [vmem:[%s204 + $0xb8] sm:$0xff]
        %s265 = sld [smem:[#allocation2 + $0xa]]
        %v266 = vstv %s265
        %v267 = vand.u32 %v241, 1
        %v268 = vand.u32 %v242, 1
        %v269 = vand.u32 %v243, 1
        %v270 = vand.u32 %v244, 1
        %v271 = vand.u32 %v245, 1
        %v272 = vand.u32 %v246, 1
        %v273 = vand.u32 %v247, 1
        %v274 = vand.u32 %v248, 1
        %v275 = vand.u32 %v249, 1
        %v276 = vand.u32 %v250, 1
        %v277 = vand.u32 %v251, 1
        %v278 = vand.u32 %v252, 1
        %v279 = vand.u32 %v253, 1
        %v280 = vand.u32 %v254, 1
        %v281 = vand.u32 %v255, 1
        %v282 = vand.u32 %v256, 1
        %v283 = vand.u32 %v257, 1
        %v284 = vand.u32 %v258, 1
        %v285 = vand.u32 %v259, 1
        %v286 = vand.u32 %v260, 1
        %v287 = vand.u32 %v261, 1
        %v288 = vand.u32 %v262, 1
        %v289 = vand.u32 %v263, 1
        %v290 = vand.u32 %v264, 1
        %vm291 = vcmp.ne.s32.totalorder %v267, 0
        %vm292 = vcmp.ne.s32.totalorder %v268, 0
        %vm293 = vcmp.ne.s32.totalorder %v269, 0
        %vm294 = vcmp.ne.s32.totalorder %v270, 0
        %vm295 = vcmp.ne.s32.totalorder %v271, 0
        %vm296 = vcmp.ne.s32.totalorder %v272, 0
        %vm297 = vcmp.ne.s32.totalorder %v273, 0
        %vm298 = vcmp.ne.s32.totalorder %v274, 0
        %vm299 = vcmp.ne.s32.totalorder %v275, 0
        %vm300 = vcmp.ne.s32.totalorder %v276, 0
        %vm301 = vcmp.ne.s32.totalorder %v277, 0
        %vm302 = vcmp.ne.s32.totalorder %v278, 0
        %vm303 = vcmp.ne.s32.totalorder %v279, 0
        %vm304 = vcmp.ne.s32.totalorder %v280, 0
        %vm305 = vcmp.ne.s32.totalorder %v281, 0
        %vm306 = vcmp.ne.s32.totalorder %v282, 0
        %vm307 = vcmp.ne.s32.totalorder %v283, 0
        %vm308 = vcmp.ne.s32.totalorder %v284, 0
        %vm309 = vcmp.ne.s32.totalorder %v285, 0
        %vm310 = vcmp.ne.s32.totalorder %v286, 0
        %vm311 = vcmp.ne.s32.totalorder %v287, 0
        %vm312 = vcmp.ne.s32.totalorder %v288, 0
        %vm313 = vcmp.ne.s32.totalorder %v289, 0
        %vm314 = vcmp.ne.s32.totalorder %v290, 0
        %s315 = sld [smem:[#allocation2]]
        %v316 = vstv %s315
        %v317 = vsel %vm291, %v316, 0.0
        %v318 = vsel %vm292, %v316, 0.0
        %v319 = vsel %vm293, %v316, 0.0
        %v320 = vsel %vm294, %v316, 0.0
        %v321 = vsel %vm295, %v316, 0.0
        %v322 = vsel %vm296, %v316, 0.0
        %v323 = vsel %vm297, %v316, 0.0
        %v324 = vsel %vm298, %v316, 0.0
        %v325 = vsel %vm299, %v316, 0.0
        %v326 = vsel %vm300, %v316, 0.0
        %v327 = vsel %vm301, %v316, 0.0
        %v328 = vsel %vm302, %v316, 0.0
        %v329 = vsel %vm303, %v316, 0.0
        %v330 = vsel %vm304, %v316, 0.0
        %v331 = vsel %vm305, %v316, 0.0
        %v332 = vsel %vm306, %v316, 0.0
        %v333 = vsel %vm307, %v316, 0.0
        %v334 = vsel %vm308, %v316, 0.0
        %v335 = vsel %vm309, %v316, 0.0
        %v336 = vsel %vm310, %v316, 0.0
        %v337 = vsel %vm311, %v316, 0.0
        %v338 = vsel %vm312, %v316, 0.0
        %v339 = vsel %vm313, %v316, 0.0
        %v340 = vsel %vm314, %v316, 0.0
        %v341 = vadd.f32 %v266, %v317
        %v342 = vadd.f32 %v266, %v318
        %v343 = vadd.f32 %v266, %v319
        %v344 = vadd.f32 %v266, %v320
        %v345 = vadd.f32 %v266, %v321
        %v346 = vadd.f32 %v266, %v322
        %v347 = vadd.f32 %v266, %v323
        %v348 = vadd.f32 %v266, %v324
        %v349 = vadd.f32 %v266, %v325
        %v350 = vadd.f32 %v266, %v326
        %v351 = vadd.f32 %v266, %v327
        %v352 = vadd.f32 %v266, %v328
        %v353 = vadd.f32 %v266, %v329
        %v354 = vadd.f32 %v266, %v330
        %v355 = vadd.f32 %v266, %v331
        %v356 = vadd.f32 %v266, %v332
        %v357 = vadd.f32 %v266, %v333
        %v358 = vadd.f32 %v266, %v334
        %v359 = vadd.f32 %v266, %v335
        %v360 = vadd.f32 %v266, %v336
        %v361 = vadd.f32 %v266, %v337
        %v362 = vadd.f32 %v266, %v338
        %v363 = vadd.f32 %v266, %v339
        %v364 = vadd.f32 %v266, %v340
        %v365 = vand.u32 %v241, 2
        %v366 = vand.u32 %v242, 2
        %v367 = vand.u32 %v243, 2
        %v368 = vand.u32 %v244, 2
        %v369 = vand.u32 %v245, 2
        %v370 = vand.u32 %v246, 2
        %v371 = vand.u32 %v247, 2
        %v372 = vand.u32 %v248, 2
        %v373 = vand.u32 %v249, 2
        %v374 = vand.u32 %v250, 2
        %v375 = vand.u32 %v251, 2
        %v376 = vand.u32 %v252, 2
        %v377 = vand.u32 %v253, 2
        %v378 = vand.u32 %v254, 2
        %v379 = vand.u32 %v255, 2
        %v380 = vand.u32 %v256, 2
        %v381 = vand.u32 %v257, 2
        %v382 = vand.u32 %v258, 2
        %v383 = vand.u32 %v259, 2
        %v384 = vand.u32 %v260, 2
        %v385 = vand.u32 %v261, 2
        %v386 = vand.u32 %v262, 2
        %v387 = vand.u32 %v263, 2
        %v388 = vand.u32 %v264, 2
        %vm389 = vcmp.ne.s32.totalorder %v365, 0
        %vm390 = vcmp.ne.s32.totalorder %v366, 0
        %vm391 = vcmp.ne.s32.totalorder %v367, 0
        %vm392 = vcmp.ne.s32.totalorder %v368, 0
        %vm393 = vcmp.ne.s32.totalorder %v369, 0
        %vm394 = vcmp.ne.s32.totalorder %v370, 0
        %vm395 = vcmp.ne.s32.totalorder %v371, 0
        %vm396 = vcmp.ne.s32.totalorder %v372, 0
        %vm397 = vcmp.ne.s32.totalorder %v373, 0
        %vm398 = vcmp.ne.s32.totalorder %v374, 0
        %vm399 = vcmp.ne.s32.totalorder %v375, 0
        %vm400 = vcmp.ne.s32.totalorder %v376, 0
        %vm401 = vcmp.ne.s32.totalorder %v377, 0
        %vm402 = vcmp.ne.s32.totalorder %v378, 0
        %vm403 = vcmp.ne.s32.totalorder %v379, 0
        %vm404 = vcmp.ne.s32.totalorder %v380, 0
        %vm405 = vcmp.ne.s32.totalorder %v381, 0
        %vm406 = vcmp.ne.s32.totalorder %v382, 0
        %vm407 = vcmp.ne.s32.totalorder %v383, 0
        %vm408 = vcmp.ne.s32.totalorder %v384, 0
        %vm409 = vcmp.ne.s32.totalorder %v385, 0
        %vm410 = vcmp.ne.s32.totalorder %v386, 0
        %vm411 = vcmp.ne.s32.totalorder %v387, 0
        %vm412 = vcmp.ne.s32.totalorder %v388, 0
        %s413 = sld [smem:[#allocation2 + $0x1]]
        %v414 = vstv %s413
        %v415 = vsel %vm389, %v414, 0.0
        %v416 = vsel %vm390, %v414, 0.0
        %v417 = vsel %vm391, %v414, 0.0
        %v418 = vsel %vm392, %v414, 0.0
        %v419 = vsel %vm393, %v414, 0.0
        %v420 = vsel %vm394, %v414, 0.0
        %v421 = vsel %vm395, %v414, 0.0
        %v422 = vsel %vm396, %v414, 0.0
        %v423 = vsel %vm397, %v414, 0.0
        %v424 = vsel %vm398, %v414, 0.0
        %v425 = vsel %vm399, %v414, 0.0
        %v426 = vsel %vm400, %v414, 0.0
        %v427 = vsel %vm401, %v414, 0.0
        %v428 = vsel %vm402, %v414, 0.0
        %v429 = vsel %vm403, %v414, 0.0
        %v430 = vsel %vm404, %v414, 0.0
        %v431 = vsel %vm405, %v414, 0.0
        %v432 = vsel %vm406, %v414, 0.0
        %v433 = vsel %vm407, %v414, 0.0
        %v434 = vsel %vm408, %v414, 0.0
        %v435 = vsel %vm409, %v414, 0.0
        %v436 = vsel %vm410, %v414, 0.0
        %v437 = vsel %vm411, %v414, 0.0
        %v438 = vsel %vm412, %v414, 0.0
        %v439 = vadd.f32 %v341, %v415
        %v440 = vadd.f32 %v342, %v416
        %v441 = vadd.f32 %v343, %v417
        %v442 = vadd.f32 %v344, %v418
        %v443 = vadd.f32 %v345, %v419
        %v444 = vadd.f32 %v346, %v420
        %v445 = vadd.f32 %v347, %v421
        %v446 = vadd.f32 %v348, %v422
        %v447 = vadd.f32 %v349, %v423
        %v448 = vadd.f32 %v350, %v424
        %v449 = vadd.f32 %v351, %v425
        %v450 = vadd.f32 %v352, %v426
        %v451 = vadd.f32 %v353, %v427
        %v452 = vadd.f32 %v354, %v428
        %v453 = vadd.f32 %v355, %v429
        %v454 = vadd.f32 %v356, %v430
        %v455 = vadd.f32 %v357, %v431
        %v456 = vadd.f32 %v358, %v432
        %v457 = vadd.f32 %v359, %v433
        %v458 = vadd.f32 %v360, %v434
        %v459 = vadd.f32 %v361, %v435
        %v460 = vadd.f32 %v362, %v436
        %v461 = vadd.f32 %v363, %v437
        %v462 = vadd.f32 %v364, %v438
        %v463 = vand.u32 %v241, 4
        %v464 = vand.u32 %v242, 4
        %v465 = vand.u32 %v243, 4
        %v466 = vand.u32 %v244, 4
        %v467 = vand.u32 %v245, 4
        %v468 = vand.u32 %v246, 4
        %v469 = vand.u32 %v247, 4
        %v470 = vand.u32 %v248, 4
        %v471 = vand.u32 %v249, 4
        %v472 = vand.u32 %v250, 4
        %v473 = vand.u32 %v251, 4
        %v474 = vand.u32 %v252, 4
        %v475 = vand.u32 %v253, 4
        %v476 = vand.u32 %v254, 4
        %v477 = vand.u32 %v255, 4
        %v478 = vand.u32 %v256, 4
        %v479 = vand.u32 %v257, 4
        %v480 = vand.u32 %v258, 4
        %v481 = vand.u32 %v259, 4
        %v482 = vand.u32 %v260, 4
        %v483 = vand.u32 %v261, 4
        %v484 = vand.u32 %v262, 4
        %v485 = vand.u32 %v263, 4
        %v486 = vand.u32 %v264, 4
        %vm487 = vcmp.ne.s32.totalorder %v463, 0
        %vm488 = vcmp.ne.s32.totalorder %v464, 0
        %vm489 = vcmp.ne.s32.totalorder %v465, 0
        %vm490 = vcmp.ne.s32.totalorder %v466, 0
        %vm491 = vcmp.ne.s32.totalorder %v467, 0
        %vm492 = vcmp.ne.s32.totalorder %v468, 0
        %vm493 = vcmp.ne.s32.totalorder %v469, 0
        %vm494 = vcmp.ne.s32.totalorder %v470, 0
        %vm495 = vcmp.ne.s32.totalorder %v471, 0
        %vm496 = vcmp.ne.s32.totalorder %v472, 0
        %vm497 = vcmp.ne.s32.totalorder %v473, 0
        %vm498 = vcmp.ne.s32.totalorder %v474, 0
        %vm499 = vcmp.ne.s32.totalorder %v475, 0
        %vm500 = vcmp.ne.s32.totalorder %v476, 0
        %vm501 = vcmp.ne.s32.totalorder %v477, 0
        %vm502 = vcmp.ne.s32.totalorder %v478, 0
        %vm503 = vcmp.ne.s32.totalorder %v479, 0
        %vm504 = vcmp.ne.s32.totalorder %v480, 0
        %vm505 = vcmp.ne.s32.totalorder %v481, 0
        %vm506 = vcmp.ne.s32.totalorder %v482, 0
        %vm507 = vcmp.ne.s32.totalorder %v483, 0
        %vm508 = vcmp.ne.s32.totalorder %v484, 0
        %vm509 = vcmp.ne.s32.totalorder %v485, 0
        %vm510 = vcmp.ne.s32.totalorder %v486, 0
        %s511 = sld [smem:[#allocation2 + $0x2]]
        %v512 = vstv %s511
        %v513 = vsel %vm487, %v512, 0.0
        %v514 = vsel %vm488, %v512, 0.0
        %v515 = vsel %vm489, %v512, 0.0
        %v516 = vsel %vm490, %v512, 0.0
        %v517 = vsel %vm491, %v512, 0.0
        %v518 = vsel %vm492, %v512, 0.0
        %v519 = vsel %vm493, %v512, 0.0
        %v520 = vsel %vm494, %v512, 0.0
        %v521 = vsel %vm495, %v512, 0.0
        %v522 = vsel %vm496, %v512, 0.0
        %v523 = vsel %vm497, %v512, 0.0
        %v524 = vsel %vm498, %v512, 0.0
        %v525 = vsel %vm499, %v512, 0.0
        %v526 = vsel %vm500, %v512, 0.0
        %v527 = vsel %vm501, %v512, 0.0
        %v528 = vsel %vm502, %v512, 0.0
        %v529 = vsel %vm503, %v512, 0.0
        %v530 = vsel %vm504, %v512, 0.0
        %v531 = vsel %vm505, %v512, 0.0
        %v532 = vsel %vm506, %v512, 0.0
        %v533 = vsel %vm507, %v512, 0.0
        %v534 = vsel %vm508, %v512, 0.0
        %v535 = vsel %vm509, %v512, 0.0
        %v536 = vsel %vm510, %v512, 0.0
        %v537 = vadd.f32 %v439, %v513
        %v538 = vadd.f32 %v440, %v514
        %v539 = vadd.f32 %v441, %v515
        %v540 = vadd.f32 %v442, %v516
        %v541 = vadd.f32 %v443, %v517
        %v542 = vadd.f32 %v444, %v518
        %v543 = vadd.f32 %v445, %v519
        %v544 = vadd.f32 %v446, %v520
        %v545 = vadd.f32 %v447, %v521
        %v546 = vadd.f32 %v448, %v522
        %v547 = vadd.f32 %v449, %v523
        %v548 = vadd.f32 %v450, %v524
        %v549 = vadd.f32 %v451, %v525
        %v550 = vadd.f32 %v452, %v526
        %v551 = vadd.f32 %v453, %v527
        %v552 = vadd.f32 %v454, %v528
        %v553 = vadd.f32 %v455, %v529
        %v554 = vadd.f32 %v456, %v530
        %v555 = vadd.f32 %v457, %v531
        %v556 = vadd.f32 %v458, %v532
        %v557 = vadd.f32 %v459, %v533
        %v558 = vadd.f32 %v460, %v534
        %v559 = vadd.f32 %v461, %v535
        %v560 = vadd.f32 %v462, %v536
        %v561 = vand.u32 %v241, 8
        %v562 = vand.u32 %v242, 8
        %v563 = vand.u32 %v243, 8
        %v564 = vand.u32 %v244, 8
        %v565 = vand.u32 %v245, 8
        %v566 = vand.u32 %v246, 8
        %v567 = vand.u32 %v247, 8
        %v568 = vand.u32 %v248, 8
        %v569 = vand.u32 %v249, 8
        %v570 = vand.u32 %v250, 8
        %v571 = vand.u32 %v251, 8
        %v572 = vand.u32 %v252, 8
        %v573 = vand.u32 %v253, 8
        %v574 = vand.u32 %v254, 8
        %v575 = vand.u32 %v255, 8
        %v576 = vand.u32 %v256, 8
        %v577 = vand.u32 %v257, 8
        %v578 = vand.u32 %v258, 8
        %v579 = vand.u32 %v259, 8
        %v580 = vand.u32 %v260, 8
        %v581 = vand.u32 %v261, 8
        %v582 = vand.u32 %v262, 8
        %v583 = vand.u32 %v263, 8
        %v584 = vand.u32 %v264, 8
        %vm585 = vcmp.ne.s32.totalorder %v561, 0
        %vm586 = vcmp.ne.s32.totalorder %v562, 0
        %vm587 = vcmp.ne.s32.totalorder %v563, 0
        %vm588 = vcmp.ne.s32.totalorder %v564, 0
        %vm589 = vcmp.ne.s32.totalorder %v565, 0
        %vm590 = vcmp.ne.s32.totalorder %v566, 0
        %vm591 = vcmp.ne.s32.totalorder %v567, 0
        %vm592 = vcmp.ne.s32.totalorder %v568, 0
        %vm593 = vcmp.ne.s32.totalorder %v569, 0
        %vm594 = vcmp.ne.s32.totalorder %v570, 0
        %vm595 = vcmp.ne.s32.totalorder %v571, 0
        %vm596 = vcmp.ne.s32.totalorder %v572, 0
        %vm597 = vcmp.ne.s32.totalorder %v573, 0
        %vm598 = vcmp.ne.s32.totalorder %v574, 0
        %vm599 = vcmp.ne.s32.totalorder %v575, 0
        %vm600 = vcmp.ne.s32.totalorder %v576, 0
        %vm601 = vcmp.ne.s32.totalorder %v577, 0
        %vm602 = vcmp.ne.s32.totalorder %v578, 0
        %vm603 = vcmp.ne.s32.totalorder %v579, 0
        %vm604 = vcmp.ne.s32.totalorder %v580, 0
        %vm605 = vcmp.ne.s32.totalorder %v581, 0
        %vm606 = vcmp.ne.s32.totalorder %v582, 0
        %vm607 = vcmp.ne.s32.totalorder %v583, 0
        %vm608 = vcmp.ne.s32.totalorder %v584, 0
        %s609 = sld [smem:[#allocation2 + $0x3]]
        %v610 = vstv %s609
        %v611 = vsel %vm585, %v610, 0.0
        %v612 = vsel %vm586, %v610, 0.0
        %v613 = vsel %vm587, %v610, 0.0
        %v614 = vsel %vm588, %v610, 0.0
        %v615 = vsel %vm589, %v610, 0.0
        %v616 = vsel %vm590, %v610, 0.0
        %v617 = vsel %vm591, %v610, 0.0
        %v618 = vsel %vm592, %v610, 0.0
        %v619 = vsel %vm593, %v610, 0.0
        %v620 = vsel %vm594, %v610, 0.0
        %v621 = vsel %vm595, %v610, 0.0
        %v622 = vsel %vm596, %v610, 0.0
        %v623 = vsel %vm597, %v610, 0.0
        %v624 = vsel %vm598, %v610, 0.0
        %v625 = vsel %vm599, %v610, 0.0
        %v626 = vsel %vm600, %v610, 0.0
        %v627 = vsel %vm601, %v610, 0.0
        %v628 = vsel %vm602, %v610, 0.0
        %v629 = vsel %vm603, %v610, 0.0
        %v630 = vsel %vm604, %v610, 0.0
        %v631 = vsel %vm605, %v610, 0.0
        %v632 = vsel %vm606, %v610, 0.0
        %v633 = vsel %vm607, %v610, 0.0
        %v634 = vsel %vm608, %v610, 0.0
        %v635 = vadd.f32 %v537, %v611
        %v636 = vadd.f32 %v538, %v612
        %v637 = vadd.f32 %v539, %v613
        %v638 = vadd.f32 %v540, %v614
        %v639 = vadd.f32 %v541, %v615
        %v640 = vadd.f32 %v542, %v616
        %v641 = vadd.f32 %v543, %v617
        %v642 = vadd.f32 %v544, %v618
        %v643 = vadd.f32 %v545, %v619
        %v644 = vadd.f32 %v546, %v620
        %v645 = vadd.f32 %v547, %v621
        %v646 = vadd.f32 %v548, %v622
        %v647 = vadd.f32 %v549, %v623
        %v648 = vadd.f32 %v550, %v624
        %v649 = vadd.f32 %v551, %v625
        %v650 = vadd.f32 %v552, %v626
        %v651 = vadd.f32 %v553, %v627
        %v652 = vadd.f32 %v554, %v628
        %v653 = vadd.f32 %v555, %v629
        %v654 = vadd.f32 %v556, %v630
        %v655 = vadd.f32 %v557, %v631
        %v656 = vadd.f32 %v558, %v632
        %v657 = vadd.f32 %v559, %v633
        %v658 = vadd.f32 %v560, %v634
        %v659 = vand.u32 %v241, 16
        %v660 = vand.u32 %v242, 16
        %v661 = vand.u32 %v243, 16
        %v662 = vand.u32 %v244, 16
        %v663 = vand.u32 %v245, 16
        %v664 = vand.u32 %v246, 16
        %v665 = vand.u32 %v247, 16
        %v666 = vand.u32 %v248, 16
        %v667 = vand.u32 %v249, 16
        %v668 = vand.u32 %v250, 16
        %v669 = vand.u32 %v251, 16
        %v670 = vand.u32 %v252, 16
        %v671 = vand.u32 %v253, 16
        %v672 = vand.u32 %v254, 16
        %v673 = vand.u32 %v255, 16
        %v674 = vand.u32 %v256, 16
        %v675 = vand.u32 %v257, 16
        %v676 = vand.u32 %v258, 16
        %v677 = vand.u32 %v259, 16
        %v678 = vand.u32 %v260, 16
        %v679 = vand.u32 %v261, 16
        %v680 = vand.u32 %v262, 16
        %v681 = vand.u32 %v263, 16
        %v682 = vand.u32 %v264, 16
        %vm683 = vcmp.ne.s32.totalorder %v659, 0
        %vm684 = vcmp.ne.s32.totalorder %v660, 0
        %vm685 = vcmp.ne.s32.totalorder %v661, 0
        %vm686 = vcmp.ne.s32.totalorder %v662, 0
        %vm687 = vcmp.ne.s32.totalorder %v663, 0
        %vm688 = vcmp.ne.s32.totalorder %v664, 0
        %vm689 = vcmp.ne.s32.totalorder %v665, 0
        %vm690 = vcmp.ne.s32.totalorder %v666, 0
        %vm691 = vcmp.ne.s32.totalorder %v667, 0
        %vm692 = vcmp.ne.s32.totalorder %v668, 0
        %vm693 = vcmp.ne.s32.totalorder %v669, 0
        %vm694 = vcmp.ne.s32.totalorder %v670, 0
        %vm695 = vcmp.ne.s32.totalorder %v671, 0
        %vm696 = vcmp.ne.s32.totalorder %v672, 0
        %vm697 = vcmp.ne.s32.totalorder %v673, 0
        %vm698 = vcmp.ne.s32.totalorder %v674, 0
        %vm699 = vcmp.ne.s32.totalorder %v675, 0
        %vm700 = vcmp.ne.s32.totalorder %v676, 0
        %vm701 = vcmp.ne.s32.totalorder %v677, 0
        %vm702 = vcmp.ne.s32.totalorder %v678, 0
        %vm703 = vcmp.ne.s32.totalorder %v679, 0
        %vm704 = vcmp.ne.s32.totalorder %v680, 0
        %vm705 = vcmp.ne.s32.totalorder %v681, 0
        %vm706 = vcmp.ne.s32.totalorder %v682, 0
        %s707 = sld [smem:[#allocation2 + $0x4]]
        %v708 = vstv %s707
        %v709 = vsel %vm683, %v708, 0.0
        %v710 = vsel %vm684, %v708, 0.0
        %v711 = vsel %vm685, %v708, 0.0
        %v712 = vsel %vm686, %v708, 0.0
        %v713 = vsel %vm687, %v708, 0.0
        %v714 = vsel %vm688, %v708, 0.0
        %v715 = vsel %vm689, %v708, 0.0
        %v716 = vsel %vm690, %v708, 0.0
        %v717 = vsel %vm691, %v708, 0.0
        %v718 = vsel %vm692, %v708, 0.0
        %v719 = vsel %vm693, %v708, 0.0
        %v720 = vsel %vm694, %v708, 0.0
        %v721 = vsel %vm695, %v708, 0.0
        %v722 = vsel %vm696, %v708, 0.0
        %v723 = vsel %vm697, %v708, 0.0
        %v724 = vsel %vm698, %v708, 0.0
        %v725 = vsel %vm699, %v708, 0.0
        %v726 = vsel %vm700, %v708, 0.0
        %v727 = vsel %vm701, %v708, 0.0
        %v728 = vsel %vm702, %v708, 0.0
        %v729 = vsel %vm703, %v708, 0.0
        %v730 = vsel %vm704, %v708, 0.0
        %v731 = vsel %vm705, %v708, 0.0
        %v732 = vsel %vm706, %v708, 0.0
        %v733 = vadd.f32 %v635, %v709
        %v734 = vadd.f32 %v636, %v710
        %v735 = vadd.f32 %v637, %v711
        %v736 = vadd.f32 %v638, %v712
        %v737 = vadd.f32 %v639, %v713
        %v738 = vadd.f32 %v640, %v714
        %v739 = vadd.f32 %v641, %v715
        %v740 = vadd.f32 %v642, %v716
        %v741 = vadd.f32 %v643, %v717
        %v742 = vadd.f32 %v644, %v718
        %v743 = vadd.f32 %v645, %v719
        %v744 = vadd.f32 %v646, %v720
        %v745 = vadd.f32 %v647, %v721
        %v746 = vadd.f32 %v648, %v722
        %v747 = vadd.f32 %v649, %v723
        %v748 = vadd.f32 %v650, %v724
        %v749 = vadd.f32 %v651, %v725
        %v750 = vadd.f32 %v652, %v726
        %v751 = vadd.f32 %v653, %v727
        %v752 = vadd.f32 %v654, %v728
        %v753 = vadd.f32 %v655, %v729
        %v754 = vadd.f32 %v656, %v730
        %v755 = vadd.f32 %v657, %v731
        %v756 = vadd.f32 %v658, %v732
        %v757 = vand.u32 %v241, 32
        %v758 = vand.u32 %v242, 32
        %v759 = vand.u32 %v243, 32
        %v760 = vand.u32 %v244, 32
        %v761 = vand.u32 %v245, 32
        %v762 = vand.u32 %v246, 32
        %v763 = vand.u32 %v247, 32
        %v764 = vand.u32 %v248, 32
        %v765 = vand.u32 %v249, 32
        %v766 = vand.u32 %v250, 32
        %v767 = vand.u32 %v251, 32
        %v768 = vand.u32 %v252, 32
        %v769 = vand.u32 %v253, 32
        %v770 = vand.u32 %v254, 32
        %v771 = vand.u32 %v255, 32
        %v772 = vand.u32 %v256, 32
        %v773 = vand.u32 %v257, 32
        %v774 = vand.u32 %v258, 32
        %v775 = vand.u32 %v259, 32
        %v776 = vand.u32 %v260, 32
        %v777 = vand.u32 %v261, 32
        %v778 = vand.u32 %v262, 32
        %v779 = vand.u32 %v263, 32
        %v780 = vand.u32 %v264, 32
        %vm781 = vcmp.ne.s32.totalorder %v757, 0
        %vm782 = vcmp.ne.s32.totalorder %v758, 0
        %vm783 = vcmp.ne.s32.totalorder %v759, 0
        %vm784 = vcmp.ne.s32.totalorder %v760, 0
        %vm785 = vcmp.ne.s32.totalorder %v761, 0
        %vm786 = vcmp.ne.s32.totalorder %v762, 0
        %vm787 = vcmp.ne.s32.totalorder %v763, 0
        %vm788 = vcmp.ne.s32.totalorder %v764, 0
        %vm789 = vcmp.ne.s32.totalorder %v765, 0
        %vm790 = vcmp.ne.s32.totalorder %v766, 0
        %vm791 = vcmp.ne.s32.totalorder %v767, 0
        %vm792 = vcmp.ne.s32.totalorder %v768, 0
        %vm793 = vcmp.ne.s32.totalorder %v769, 0
        %vm794 = vcmp.ne.s32.totalorder %v770, 0
        %vm795 = vcmp.ne.s32.totalorder %v771, 0
        %vm796 = vcmp.ne.s32.totalorder %v772, 0
        %vm797 = vcmp.ne.s32.totalorder %v773, 0
        %vm798 = vcmp.ne.s32.totalorder %v774, 0
        %vm799 = vcmp.ne.s32.totalorder %v775, 0
        %vm800 = vcmp.ne.s32.totalorder %v776, 0
        %vm801 = vcmp.ne.s32.totalorder %v777, 0
        %vm802 = vcmp.ne.s32.totalorder %v778, 0
        %vm803 = vcmp.ne.s32.totalorder %v779, 0
        %vm804 = vcmp.ne.s32.totalorder %v780, 0
        %s805 = sld [smem:[#allocation2 + $0x5]]
        %v806 = vstv %s805
        %v807 = vsel %vm781, %v806, 0.0
        %v808 = vsel %vm782, %v806, 0.0
        %v809 = vsel %vm783, %v806, 0.0
        %v810 = vsel %vm784, %v806, 0.0
        %v811 = vsel %vm785, %v806, 0.0
        %v812 = vsel %vm786, %v806, 0.0
        %v813 = vsel %vm787, %v806, 0.0
        %v814 = vsel %vm788, %v806, 0.0
        %v815 = vsel %vm789, %v806, 0.0
        %v816 = vsel %vm790, %v806, 0.0
        %v817 = vsel %vm791, %v806, 0.0
        %v818 = vsel %vm792, %v806, 0.0
        %v819 = vsel %vm793, %v806, 0.0
        %v820 = vsel %vm794, %v806, 0.0
        %v821 = vsel %vm795, %v806, 0.0
        %v822 = vsel %vm796, %v806, 0.0
        %v823 = vsel %vm797, %v806, 0.0
        %v824 = vsel %vm798, %v806, 0.0
        %v825 = vsel %vm799, %v806, 0.0
        %v826 = vsel %vm800, %v806, 0.0
        %v827 = vsel %vm801, %v806, 0.0
        %v828 = vsel %vm802, %v806, 0.0
        %v829 = vsel %vm803, %v806, 0.0
        %v830 = vsel %vm804, %v806, 0.0
        %v831 = vadd.f32 %v733, %v807
        %v832 = vadd.f32 %v734, %v808
        %v833 = vadd.f32 %v735, %v809
        %v834 = vadd.f32 %v736, %v810
        %v835 = vadd.f32 %v737, %v811
        %v836 = vadd.f32 %v738, %v812
        %v837 = vadd.f32 %v739, %v813
        %v838 = vadd.f32 %v740, %v814
        %v839 = vadd.f32 %v741, %v815
        %v840 = vadd.f32 %v742, %v816
        %v841 = vadd.f32 %v743, %v817
        %v842 = vadd.f32 %v744, %v818
        %v843 = vadd.f32 %v745, %v819
        %v844 = vadd.f32 %v746, %v820
        %v845 = vadd.f32 %v747, %v821
        %v846 = vadd.f32 %v748, %v822
        %v847 = vadd.f32 %v749, %v823
        %v848 = vadd.f32 %v750, %v824
        %v849 = vadd.f32 %v751, %v825
        %v850 = vadd.f32 %v752, %v826
        %v851 = vadd.f32 %v753, %v827
        %v852 = vadd.f32 %v754, %v828
        %v853 = vadd.f32 %v755, %v829
        %v854 = vadd.f32 %v756, %v830
        %v855 = vand.u32 %v241, 64
        %v856 = vand.u32 %v242, 64
        %v857 = vand.u32 %v243, 64
        %v858 = vand.u32 %v244, 64
        %v859 = vand.u32 %v245, 64
        %v860 = vand.u32 %v246, 64
        %v861 = vand.u32 %v247, 64
        %v862 = vand.u32 %v248, 64
        %v863 = vand.u32 %v249, 64
        %v864 = vand.u32 %v250, 64
        %v865 = vand.u32 %v251, 64
        %v866 = vand.u32 %v252, 64
        %v867 = vand.u32 %v253, 64
        %v868 = vand.u32 %v254, 64
        %v869 = vand.u32 %v255, 64
        %v870 = vand.u32 %v256, 64
        %v871 = vand.u32 %v257, 64
        %v872 = vand.u32 %v258, 64
        %v873 = vand.u32 %v259, 64
        %v874 = vand.u32 %v260, 64
        %v875 = vand.u32 %v261, 64
        %v876 = vand.u32 %v262, 64
        %v877 = vand.u32 %v263, 64
        %v878 = vand.u32 %v264, 64
        %vm879 = vcmp.ne.s32.totalorder %v855, 0
        %vm880 = vcmp.ne.s32.totalorder %v856, 0
        %vm881 = vcmp.ne.s32.totalorder %v857, 0
        %vm882 = vcmp.ne.s32.totalorder %v858, 0
        %vm883 = vcmp.ne.s32.totalorder %v859, 0
        %vm884 = vcmp.ne.s32.totalorder %v860, 0
        %vm885 = vcmp.ne.s32.totalorder %v861, 0
        %vm886 = vcmp.ne.s32.totalorder %v862, 0
        %vm887 = vcmp.ne.s32.totalorder %v863, 0
        %vm888 = vcmp.ne.s32.totalorder %v864, 0
        %vm889 = vcmp.ne.s32.totalorder %v865, 0
        %vm890 = vcmp.ne.s32.totalorder %v866, 0
        %vm891 = vcmp.ne.s32.totalorder %v867, 0
        %vm892 = vcmp.ne.s32.totalorder %v868, 0
        %vm893 = vcmp.ne.s32.totalorder %v869, 0
        %vm894 = vcmp.ne.s32.totalorder %v870, 0
        %vm895 = vcmp.ne.s32.totalorder %v871, 0
        %vm896 = vcmp.ne.s32.totalorder %v872, 0
        %vm897 = vcmp.ne.s32.totalorder %v873, 0
        %vm898 = vcmp.ne.s32.totalorder %v874, 0
        %vm899 = vcmp.ne.s32.totalorder %v875, 0
        %vm900 = vcmp.ne.s32.totalorder %v876, 0
        %vm901 = vcmp.ne.s32.totalorder %v877, 0
        %vm902 = vcmp.ne.s32.totalorder %v878, 0
        %s903 = sld [smem:[#allocation2 + $0x6]]
        %v904 = vstv %s903
        %v905 = vsel %vm879, %v904, 0.0
        %v906 = vsel %vm880, %v904, 0.0
        %v907 = vsel %vm881, %v904, 0.0
        %v908 = vsel %vm882, %v904, 0.0
        %v909 = vsel %vm883, %v904, 0.0
        %v910 = vsel %vm884, %v904, 0.0
        %v911 = vsel %vm885, %v904, 0.0
        %v912 = vsel %vm886, %v904, 0.0
        %v913 = vsel %vm887, %v904, 0.0
        %v914 = vsel %vm888, %v904, 0.0
        %v915 = vsel %vm889, %v904, 0.0
        %v916 = vsel %vm890, %v904, 0.0
        %v917 = vsel %vm891, %v904, 0.0
        %v918 = vsel %vm892, %v904, 0.0
        %v919 = vsel %vm893, %v904, 0.0
        %v920 = vsel %vm894, %v904, 0.0
        %v921 = vsel %vm895, %v904, 0.0
        %v922 = vsel %vm896, %v904, 0.0
        %v923 = vsel %vm897, %v904, 0.0
        %v924 = vsel %vm898, %v904, 0.0
        %v925 = vsel %vm899, %v904, 0.0
        %v926 = vsel %vm900, %v904, 0.0
        %v927 = vsel %vm901, %v904, 0.0
        %v928 = vsel %vm902, %v904, 0.0
        %v929 = vadd.f32 %v831, %v905
        %v930 = vadd.f32 %v832, %v906
        %v931 = vadd.f32 %v833, %v907
        %v932 = vadd.f32 %v834, %v908
        %v933 = vadd.f32 %v835, %v909
        %v934 = vadd.f32 %v836, %v910
        %v935 = vadd.f32 %v837, %v911
        %v936 = vadd.f32 %v838, %v912
        %v937 = vadd.f32 %v839, %v913
        %v938 = vadd.f32 %v840, %v914
        %v939 = vadd.f32 %v841, %v915
        %v940 = vadd.f32 %v842, %v916
        %v941 = vadd.f32 %v843, %v917
        %v942 = vadd.f32 %v844, %v918
        %v943 = vadd.f32 %v845, %v919
        %v944 = vadd.f32 %v846, %v920
        %v945 = vadd.f32 %v847, %v921
        %v946 = vadd.f32 %v848, %v922
        %v947 = vadd.f32 %v849, %v923
        %v948 = vadd.f32 %v850, %v924
        %v949 = vadd.f32 %v851, %v925
        %v950 = vadd.f32 %v852, %v926
        %v951 = vadd.f32 %v853, %v927
        %v952 = vadd.f32 %v854, %v928
        %v953 = vand.u32 %v241, 128
        %v954 = vand.u32 %v242, 128
        %v955 = vand.u32 %v243, 128
        %v956 = vand.u32 %v244, 128
        %v957 = vand.u32 %v245, 128
        %v958 = vand.u32 %v246, 128
        %v959 = vand.u32 %v247, 128
        %v960 = vand.u32 %v248, 128
        %v961 = vand.u32 %v249, 128
        %v962 = vand.u32 %v250, 128
        %v963 = vand.u32 %v251, 128
        %v964 = vand.u32 %v252, 128
        %v965 = vand.u32 %v253, 128
        %v966 = vand.u32 %v254, 128
        %v967 = vand.u32 %v255, 128
        %v968 = vand.u32 %v256, 128
        %v969 = vand.u32 %v257, 128
        %v970 = vand.u32 %v258, 128
        %v971 = vand.u32 %v259, 128
        %v972 = vand.u32 %v260, 128
        %v973 = vand.u32 %v261, 128
        %v974 = vand.u32 %v262, 128
        %v975 = vand.u32 %v263, 128
        %v976 = vand.u32 %v264, 128
        %vm977 = vcmp.ne.s32.totalorder %v953, 0
        %vm978 = vcmp.ne.s32.totalorder %v954, 0
        %vm979 = vcmp.ne.s32.totalorder %v955, 0
        %vm980 = vcmp.ne.s32.totalorder %v956, 0
        %vm981 = vcmp.ne.s32.totalorder %v957, 0
        %vm982 = vcmp.ne.s32.totalorder %v958, 0
        %vm983 = vcmp.ne.s32.totalorder %v959, 0
        %vm984 = vcmp.ne.s32.totalorder %v960, 0
        %vm985 = vcmp.ne.s32.totalorder %v961, 0
        %vm986 = vcmp.ne.s32.totalorder %v962, 0
        %vm987 = vcmp.ne.s32.totalorder %v963, 0
        %vm988 = vcmp.ne.s32.totalorder %v964, 0
        %vm989 = vcmp.ne.s32.totalorder %v965, 0
        %vm990 = vcmp.ne.s32.totalorder %v966, 0
        %vm991 = vcmp.ne.s32.totalorder %v967, 0
        %vm992 = vcmp.ne.s32.totalorder %v968, 0
        %vm993 = vcmp.ne.s32.totalorder %v969, 0
        %vm994 = vcmp.ne.s32.totalorder %v970, 0
        %vm995 = vcmp.ne.s32.totalorder %v971, 0
        %vm996 = vcmp.ne.s32.totalorder %v972, 0
        %vm997 = vcmp.ne.s32.totalorder %v973, 0
        %vm998 = vcmp.ne.s32.totalorder %v974, 0
        %vm999 = vcmp.ne.s32.totalorder %v975, 0
        %vm1000 = vcmp.ne.s32.totalorder %v976, 0
        %s1001 = sld [smem:[#allocation2 + $0x7]]
        %v1002 = vstv %s1001
        %v1003 = vsel %vm977, %v1002, 0.0
        %v1004 = vsel %vm978, %v1002, 0.0
        %v1005 = vsel %vm979, %v1002, 0.0
        %v1006 = vsel %vm980, %v1002, 0.0
        %v1007 = vsel %vm981, %v1002, 0.0
        %v1008 = vsel %vm982, %v1002, 0.0
        %v1009 = vsel %vm983, %v1002, 0.0
        %v1010 = vsel %vm984, %v1002, 0.0
        %v1011 = vsel %vm985, %v1002, 0.0
        %v1012 = vsel %vm986, %v1002, 0.0
        %v1013 = vsel %vm987, %v1002, 0.0
        %v1014 = vsel %vm988, %v1002, 0.0
        %v1015 = vsel %vm989, %v1002, 0.0
        %v1016 = vsel %vm990, %v1002, 0.0
        %v1017 = vsel %vm991, %v1002, 0.0
        %v1018 = vsel %vm992, %v1002, 0.0
        %v1019 = vsel %vm993, %v1002, 0.0
        %v1020 = vsel %vm994, %v1002, 0.0
        %v1021 = vsel %vm995, %v1002, 0.0
        %v1022 = vsel %vm996, %v1002, 0.0
        %v1023 = vsel %vm997, %v1002, 0.0
        %v1024 = vsel %vm998, %v1002, 0.0
        %v1025 = vsel %vm999, %v1002, 0.0
        %v1026 = vsel %vm1000, %v1002, 0.0
        %v1027 = vadd.f32 %v929, %v1003
        %v1028 = vadd.f32 %v930, %v1004
        %v1029 = vadd.f32 %v931, %v1005
        %v1030 = vadd.f32 %v932, %v1006
        %v1031 = vadd.f32 %v933, %v1007
        %v1032 = vadd.f32 %v934, %v1008
        %v1033 = vadd.f32 %v935, %v1009
        %v1034 = vadd.f32 %v936, %v1010
        %v1035 = vadd.f32 %v937, %v1011
        %v1036 = vadd.f32 %v938, %v1012
        %v1037 = vadd.f32 %v939, %v1013
        %v1038 = vadd.f32 %v940, %v1014
        %v1039 = vadd.f32 %v941, %v1015
        %v1040 = vadd.f32 %v942, %v1016
        %v1041 = vadd.f32 %v943, %v1017
        %v1042 = vadd.f32 %v944, %v1018
        %v1043 = vadd.f32 %v945, %v1019
        %v1044 = vadd.f32 %v946, %v1020
        %v1045 = vadd.f32 %v947, %v1021
        %v1046 = vadd.f32 %v948, %v1022
        %v1047 = vadd.f32 %v949, %v1023
        %v1048 = vadd.f32 %v950, %v1024
        %v1049 = vadd.f32 %v951, %v1025
        %v1050 = vadd.f32 %v952, %v1026
        %v1051 = vand.u32 %v241, 256
        %v1052 = vand.u32 %v242, 256
        %v1053 = vand.u32 %v243, 256
        %v1054 = vand.u32 %v244, 256
        %v1055 = vand.u32 %v245, 256
        %v1056 = vand.u32 %v246, 256
        %v1057 = vand.u32 %v247, 256
        %v1058 = vand.u32 %v248, 256
        %v1059 = vand.u32 %v249, 256
        %v1060 = vand.u32 %v250, 256
        %v1061 = vand.u32 %v251, 256
        %v1062 = vand.u32 %v252, 256
        %v1063 = vand.u32 %v253, 256
        %v1064 = vand.u32 %v254, 256
        %v1065 = vand.u32 %v255, 256
        %v1066 = vand.u32 %v256, 256
        %v1067 = vand.u32 %v257, 256
        %v1068 = vand.u32 %v258, 256
        %v1069 = vand.u32 %v259, 256
        %v1070 = vand.u32 %v260, 256
        %v1071 = vand.u32 %v261, 256
        %v1072 = vand.u32 %v262, 256
        %v1073 = vand.u32 %v263, 256
        %v1074 = vand.u32 %v264, 256
        %vm1075 = vcmp.ne.s32.totalorder %v1051, 0
        %vm1076 = vcmp.ne.s32.totalorder %v1052, 0
        %vm1077 = vcmp.ne.s32.totalorder %v1053, 0
        %vm1078 = vcmp.ne.s32.totalorder %v1054, 0
        %vm1079 = vcmp.ne.s32.totalorder %v1055, 0
        %vm1080 = vcmp.ne.s32.totalorder %v1056, 0
        %vm1081 = vcmp.ne.s32.totalorder %v1057, 0
        %vm1082 = vcmp.ne.s32.totalorder %v1058, 0
        %vm1083 = vcmp.ne.s32.totalorder %v1059, 0
        %vm1084 = vcmp.ne.s32.totalorder %v1060, 0
        %vm1085 = vcmp.ne.s32.totalorder %v1061, 0
        %vm1086 = vcmp.ne.s32.totalorder %v1062, 0
        %vm1087 = vcmp.ne.s32.totalorder %v1063, 0
        %vm1088 = vcmp.ne.s32.totalorder %v1064, 0
        %vm1089 = vcmp.ne.s32.totalorder %v1065, 0
        %vm1090 = vcmp.ne.s32.totalorder %v1066, 0
        %vm1091 = vcmp.ne.s32.totalorder %v1067, 0
        %vm1092 = vcmp.ne.s32.totalorder %v1068, 0
        %vm1093 = vcmp.ne.s32.totalorder %v1069, 0
        %vm1094 = vcmp.ne.s32.totalorder %v1070, 0
        %vm1095 = vcmp.ne.s32.totalorder %v1071, 0
        %vm1096 = vcmp.ne.s32.totalorder %v1072, 0
        %vm1097 = vcmp.ne.s32.totalorder %v1073, 0
        %vm1098 = vcmp.ne.s32.totalorder %v1074, 0
        %s1099 = sld [smem:[#allocation2 + $0x8]]
        %v1100 = vstv %s1099
        %v1101 = vsel %vm1075, %v1100, 0.0
        %v1102 = vsel %vm1076, %v1100, 0.0
        %v1103 = vsel %vm1077, %v1100, 0.0
        %v1104 = vsel %vm1078, %v1100, 0.0
        %v1105 = vsel %vm1079, %v1100, 0.0
        %v1106 = vsel %vm1080, %v1100, 0.0
        %v1107 = vsel %vm1081, %v1100, 0.0
        %v1108 = vsel %vm1082, %v1100, 0.0
        %v1109 = vsel %vm1083, %v1100, 0.0
        %v1110 = vsel %vm1084, %v1100, 0.0
        %v1111 = vsel %vm1085, %v1100, 0.0
        %v1112 = vsel %vm1086, %v1100, 0.0
        %v1113 = vsel %vm1087, %v1100, 0.0
        %v1114 = vsel %vm1088, %v1100, 0.0
        %v1115 = vsel %vm1089, %v1100, 0.0
        %v1116 = vsel %vm1090, %v1100, 0.0
        %v1117 = vsel %vm1091, %v1100, 0.0
        %v1118 = vsel %vm1092, %v1100, 0.0
        %v1119 = vsel %vm1093, %v1100, 0.0
        %v1120 = vsel %vm1094, %v1100, 0.0
        %v1121 = vsel %vm1095, %v1100, 0.0
        %v1122 = vsel %vm1096, %v1100, 0.0
        %v1123 = vsel %vm1097, %v1100, 0.0
        %v1124 = vsel %vm1098, %v1100, 0.0
        %v1125 = vadd.f32 %v1027, %v1101
        %v1126 = vadd.f32 %v1028, %v1102
        %v1127 = vadd.f32 %v1029, %v1103
        %v1128 = vadd.f32 %v1030, %v1104
        %v1129 = vadd.f32 %v1031, %v1105
        %v1130 = vadd.f32 %v1032, %v1106
        %v1131 = vadd.f32 %v1033, %v1107
        %v1132 = vadd.f32 %v1034, %v1108
        %v1133 = vadd.f32 %v1035, %v1109
        %v1134 = vadd.f32 %v1036, %v1110
        %v1135 = vadd.f32 %v1037, %v1111
        %v1136 = vadd.f32 %v1038, %v1112
        %v1137 = vadd.f32 %v1039, %v1113
        %v1138 = vadd.f32 %v1040, %v1114
        %v1139 = vadd.f32 %v1041, %v1115
        %v1140 = vadd.f32 %v1042, %v1116
        %v1141 = vadd.f32 %v1043, %v1117
        %v1142 = vadd.f32 %v1044, %v1118
        %v1143 = vadd.f32 %v1045, %v1119
        %v1144 = vadd.f32 %v1046, %v1120
        %v1145 = vadd.f32 %v1047, %v1121
        %v1146 = vadd.f32 %v1048, %v1122
        %v1147 = vadd.f32 %v1049, %v1123
        %v1148 = vadd.f32 %v1050, %v1124
        %v1149 = vand.u32 %v241, 512
        %v1150 = vand.u32 %v242, 512
        %v1151 = vand.u32 %v243, 512
        %v1152 = vand.u32 %v244, 512
        %v1153 = vand.u32 %v245, 512
        %v1154 = vand.u32 %v246, 512
        %v1155 = vand.u32 %v247, 512
        %v1156 = vand.u32 %v248, 512
        %v1157 = vand.u32 %v249, 512
        %v1158 = vand.u32 %v250, 512
        %v1159 = vand.u32 %v251, 512
        %v1160 = vand.u32 %v252, 512
        %v1161 = vand.u32 %v253, 512
        %v1162 = vand.u32 %v254, 512
        %v1163 = vand.u32 %v255, 512
        %v1164 = vand.u32 %v256, 512
        %v1165 = vand.u32 %v257, 512
        %v1166 = vand.u32 %v258, 512
        %v1167 = vand.u32 %v259, 512
        %v1168 = vand.u32 %v260, 512
        %v1169 = vand.u32 %v261, 512
        %v1170 = vand.u32 %v262, 512
        %v1171 = vand.u32 %v263, 512
        %v1172 = vand.u32 %v264, 512
        %vm1173 = vcmp.ne.s32.totalorder %v1149, 0
        %vm1174 = vcmp.ne.s32.totalorder %v1150, 0
        %vm1175 = vcmp.ne.s32.totalorder %v1151, 0
        %vm1176 = vcmp.ne.s32.totalorder %v1152, 0
        %vm1177 = vcmp.ne.s32.totalorder %v1153, 0
        %vm1178 = vcmp.ne.s32.totalorder %v1154, 0
        %vm1179 = vcmp.ne.s32.totalorder %v1155, 0
        %vm1180 = vcmp.ne.s32.totalorder %v1156, 0
        %vm1181 = vcmp.ne.s32.totalorder %v1157, 0
        %vm1182 = vcmp.ne.s32.totalorder %v1158, 0
        %vm1183 = vcmp.ne.s32.totalorder %v1159, 0
        %vm1184 = vcmp.ne.s32.totalorder %v1160, 0
        %vm1185 = vcmp.ne.s32.totalorder %v1161, 0
        %vm1186 = vcmp.ne.s32.totalorder %v1162, 0
        %vm1187 = vcmp.ne.s32.totalorder %v1163, 0
        %vm1188 = vcmp.ne.s32.totalorder %v1164, 0
        %vm1189 = vcmp.ne.s32.totalorder %v1165, 0
        %vm1190 = vcmp.ne.s32.totalorder %v1166, 0
        %vm1191 = vcmp.ne.s32.totalorder %v1167, 0
        %vm1192 = vcmp.ne.s32.totalorder %v1168, 0
        %vm1193 = vcmp.ne.s32.totalorder %v1169, 0
        %vm1194 = vcmp.ne.s32.totalorder %v1170, 0
        %vm1195 = vcmp.ne.s32.totalorder %v1171, 0
        %vm1196 = vcmp.ne.s32.totalorder %v1172, 0
        %s1197 = sld [smem:[#allocation2 + $0x9]]
        %v1198 = vstv %s1197
        %v1199 = vsel %vm1173, %v1198, 0.0
        %v1200 = vsel %vm1174, %v1198, 0.0
        %v1201 = vsel %vm1175, %v1198, 0.0
        %v1202 = vsel %vm1176, %v1198, 0.0
        %v1203 = vsel %vm1177, %v1198, 0.0
        %v1204 = vsel %vm1178, %v1198, 0.0
        %v1205 = vsel %vm1179, %v1198, 0.0
        %v1206 = vsel %vm1180, %v1198, 0.0
        %v1207 = vsel %vm1181, %v1198, 0.0
        %v1208 = vsel %vm1182, %v1198, 0.0
        %v1209 = vsel %vm1183, %v1198, 0.0
        %v1210 = vsel %vm1184, %v1198, 0.0
        %v1211 = vsel %vm1185, %v1198, 0.0
        %v1212 = vsel %vm1186, %v1198, 0.0
        %v1213 = vsel %vm1187, %v1198, 0.0
        %v1214 = vsel %vm1188, %v1198, 0.0
        %v1215 = vsel %vm1189, %v1198, 0.0
        %v1216 = vsel %vm1190, %v1198, 0.0
        %v1217 = vsel %vm1191, %v1198, 0.0
        %v1218 = vsel %vm1192, %v1198, 0.0
        %v1219 = vsel %vm1193, %v1198, 0.0
        %v1220 = vsel %vm1194, %v1198, 0.0
        %v1221 = vsel %vm1195, %v1198, 0.0
        %v1222 = vsel %vm1196, %v1198, 0.0
        %v1223 = vadd.f32 %v1125, %v1199
        %v1224 = vadd.f32 %v1126, %v1200
        %v1225 = vadd.f32 %v1127, %v1201
        %v1226 = vadd.f32 %v1128, %v1202
        %v1227 = vadd.f32 %v1129, %v1203
        %v1228 = vadd.f32 %v1130, %v1204
        %v1229 = vadd.f32 %v1131, %v1205
        %v1230 = vadd.f32 %v1132, %v1206
        %v1231 = vadd.f32 %v1133, %v1207
        %v1232 = vadd.f32 %v1134, %v1208
        %v1233 = vadd.f32 %v1135, %v1209
        %v1234 = vadd.f32 %v1136, %v1210
        %v1235 = vadd.f32 %v1137, %v1211
        %v1236 = vadd.f32 %v1138, %v1212
        %v1237 = vadd.f32 %v1139, %v1213
        %v1238 = vadd.f32 %v1140, %v1214
        %v1239 = vadd.f32 %v1141, %v1215
        %v1240 = vadd.f32 %v1142, %v1216
        %v1241 = vadd.f32 %v1143, %v1217
        %v1242 = vadd.f32 %v1144, %v1218
        %v1243 = vadd.f32 %v1145, %v1219
        %v1244 = vadd.f32 %v1146, %v1220
        %v1245 = vadd.f32 %v1147, %v1221
        %v1246 = vadd.f32 %v1148, %v1222
        %vm1247 = vcmp.gt.f32.partialorder %v1223, 0.0
        %vm1248 = vcmp.gt.f32.partialorder %v1224, 0.0
        %vm1249 = vcmp.gt.f32.partialorder %v1225, 0.0
        %vm1250 = vcmp.gt.f32.partialorder %v1226, 0.0
        %vm1251 = vcmp.gt.f32.partialorder %v1227, 0.0
        %vm1252 = vcmp.gt.f32.partialorder %v1228, 0.0
        %vm1253 = vcmp.gt.f32.partialorder %v1229, 0.0
        %vm1254 = vcmp.gt.f32.partialorder %v1230, 0.0
        %vm1255 = vcmp.gt.f32.partialorder %v1231, 0.0
        %vm1256 = vcmp.gt.f32.partialorder %v1232, 0.0
        %vm1257 = vcmp.gt.f32.partialorder %v1233, 0.0
        %vm1258 = vcmp.gt.f32.partialorder %v1234, 0.0
        %vm1259 = vcmp.gt.f32.partialorder %v1235, 0.0
        %vm1260 = vcmp.gt.f32.partialorder %v1236, 0.0
        %vm1261 = vcmp.gt.f32.partialorder %v1237, 0.0
        %vm1262 = vcmp.gt.f32.partialorder %v1238, 0.0
        %vm1263 = vcmp.gt.f32.partialorder %v1239, 0.0
        %vm1264 = vcmp.gt.f32.partialorder %v1240, 0.0
        %vm1265 = vcmp.gt.f32.partialorder %v1241, 0.0
        %vm1266 = vcmp.gt.f32.partialorder %v1242, 0.0
        %vm1267 = vcmp.gt.f32.partialorder %v1243, 0.0
        %vm1268 = vcmp.gt.f32.partialorder %v1244, 0.0
        %vm1269 = vcmp.gt.f32.partialorder %v1245, 0.0
        %vm1270 = vcmp.gt.f32.partialorder %v1246, 0.0
        %vm1271 = vmpackc.low %vm1250, %vm1247
        %vm1272 = vmpackc.low %vm1256, %vm1253
        %vm1273 = vmpackc.even %vm1272, %vm1271
        %vm1274 = vmpackc.low %vm1251, %vm1248
        %vm1275 = vmpackc.low %vm1257, %vm1254
        %vm1276 = vmpackc.even %vm1275, %vm1274
        %vm1277 = vmpackc.low %vm1252, %vm1249
        %vm1278 = vmpackc.low %vm1258, %vm1255
        %vm1279 = vmpackc.even %vm1278, %vm1277
        %vm1280 = vmpackc.low %vm1262, %vm1259
        %vm1281 = vmpackc.low %vm1268, %vm1265
        %vm1282 = vmpackc.even %vm1281, %vm1280
        %vm1283 = vmpackc.low %vm1263, %vm1260
        %vm1284 = vmpackc.low %vm1269, %vm1266
        %vm1285 = vmpackc.even %vm1284, %vm1283
        %vm1286 = vmpackc.low %vm1264, %vm1261
        %vm1287 = vmpackc.low %vm1270, %vm1267
        %vm1288 = vmpackc.even %vm1287, %vm1286
        %v1289 = vsel %vm1273, 16843009, 0
        %v1290 = vsel %vm1276, 16843009, 0
        %v1291 = vsel %vm1279, 16843009, 0
        %v1292 = vsel %vm1282, 16843009, 0
        %v1293 = vsel %vm1285, 16843009, 0
        %v1294 = vsel %vm1288, 16843009, 0
        %1295 = vst [vmem:[%s232] sm:$0xff] %v1289
        %1296 = vst [vmem:[%s232 + $0x8] sm:$0xff] %v1290
        %1297 = vst [vmem:[%s232 + $0x10] sm:$0xff] %v1291
        %1298 = vst [vmem:[%s232 + $0x18] sm:$0xff] %v1292
        %1299 = vst [vmem:[%s232 + $0x20] sm:$0xff] %v1293
        %1300 = vst [vmem:[%s232 + $0x28] sm:$0xff] %v1294
        %v1301 = vmax.f32 %v1223, -60.0
        %v1302 = vmax.f32 %v1224, -60.0
        %v1303 = vmax.f32 %v1225, -60.0
        %v1304 = vmax.f32 %v1226, -60.0
        %v1305 = vmax.f32 %v1227, -60.0
        %v1306 = vmax.f32 %v1228, -60.0
        %v1307 = vmax.f32 %v1229, -60.0
        %v1308 = vmax.f32 %v1230, -60.0
        %v1309 = vmax.f32 %v1231, -60.0
        %v1310 = vmax.f32 %v1232, -60.0
        %v1311 = vmax.f32 %v1233, -60.0
        %v1312 = vmax.f32 %v1234, -60.0
        %v1313 = vmax.f32 %v1235, -60.0
        %v1314 = vmax.f32 %v1236, -60.0
        %v1315 = vmax.f32 %v1237, -60.0
        %v1316 = vmax.f32 %v1238, -60.0
        %v1317 = vmax.f32 %v1239, -60.0
        %v1318 = vmax.f32 %v1240, -60.0
        %v1319 = vmax.f32 %v1241, -60.0
        %v1320 = vmax.f32 %v1242, -60.0
        %v1321 = vmax.f32 %v1243, -60.0
        %v1322 = vmax.f32 %v1244, -60.0
        %v1323 = vmax.f32 %v1245, -60.0
        %v1324 = vmax.f32 %v1246, -60.0
        %v1325 = vmin.f32 %v1301, 60.0
        %v1326 = vmin.f32 %v1302, 60.0
        %v1327 = vmin.f32 %v1303, 60.0
        %v1328 = vmin.f32 %v1304, 60.0
        %v1329 = vmin.f32 %v1305, 60.0
        %v1330 = vmin.f32 %v1306, 60.0
        %v1331 = vmin.f32 %v1307, 60.0
        %v1332 = vmin.f32 %v1308, 60.0
        %v1333 = vmin.f32 %v1309, 60.0
        %v1334 = vmin.f32 %v1310, 60.0
        %v1335 = vmin.f32 %v1311, 60.0
        %v1336 = vmin.f32 %v1312, 60.0
        %v1337 = vmin.f32 %v1313, 60.0
        %v1338 = vmin.f32 %v1314, 60.0
        %v1339 = vmin.f32 %v1315, 60.0
        %v1340 = vmin.f32 %v1316, 60.0
        %v1341 = vmin.f32 %v1317, 60.0
        %v1342 = vmin.f32 %v1318, 60.0
        %v1343 = vmin.f32 %v1319, 60.0
        %v1344 = vmin.f32 %v1320, 60.0
        %v1345 = vmin.f32 %v1321, 60.0
        %v1346 = vmin.f32 %v1322, 60.0
        %v1347 = vmin.f32 %v1323, 60.0
        %v1348 = vmin.f32 %v1324, 60.0
        %v1349 = vsub.f32 0.0, %v1325
        %v1350 = vsub.f32 0.0, %v1326
        %v1351 = vsub.f32 0.0, %v1327
        %v1352 = vsub.f32 0.0, %v1328
        %v1353 = vsub.f32 0.0, %v1329
        %v1354 = vsub.f32 0.0, %v1330
        %v1355 = vsub.f32 0.0, %v1331
        %v1356 = vsub.f32 0.0, %v1332
        %v1357 = vsub.f32 0.0, %v1333
        %v1358 = vsub.f32 0.0, %v1334
        %v1359 = vsub.f32 0.0, %v1335
        %v1360 = vsub.f32 0.0, %v1336
        %v1361 = vsub.f32 0.0, %v1337
        %v1362 = vsub.f32 0.0, %v1338
        %v1363 = vsub.f32 0.0, %v1339
        %v1364 = vsub.f32 0.0, %v1340
        %v1365 = vsub.f32 0.0, %v1341
        %v1366 = vsub.f32 0.0, %v1342
        %v1367 = vsub.f32 0.0, %v1343
        %v1368 = vsub.f32 0.0, %v1344
        %v1369 = vsub.f32 0.0, %v1345
        %v1370 = vsub.f32 0.0, %v1346
        %v1371 = vsub.f32 0.0, %v1347
        %v1372 = vsub.f32 0.0, %v1348
        %v1373 = vmul.f32 %v1349, 1.442695
        %v1374 = vpow.pop %v1373
        %v1375 = vmul.f32 %v1350, 1.442695
        %v1376 = vpow.pop %v1375
        %v1377 = vmul.f32 %v1351, 1.442695
        %v1378 = vpow.pop %v1377
        %v1379 = vmul.f32 %v1352, 1.442695
        %v1380 = vpow.pop %v1379
        %v1381 = vmul.f32 %v1353, 1.442695
        %v1382 = vpow.pop %v1381
        %v1383 = vmul.f32 %v1354, 1.442695
        %v1384 = vpow.pop %v1383
        %v1385 = vmul.f32 %v1355, 1.442695
        %v1386 = vpow.pop %v1385
        %v1387 = vmul.f32 %v1356, 1.442695
        %v1388 = vpow.pop %v1387
        %v1389 = vmul.f32 %v1357, 1.442695
        %v1390 = vpow.pop %v1389
        %v1391 = vmul.f32 %v1358, 1.442695
        %v1392 = vpow.pop %v1391
        %v1393 = vmul.f32 %v1359, 1.442695
        %v1394 = vpow.pop %v1393
        %v1395 = vmul.f32 %v1360, 1.442695
        %v1396 = vpow.pop %v1395
        %v1397 = vmul.f32 %v1361, 1.442695
        %v1398 = vpow.pop %v1397
        %v1399 = vmul.f32 %v1362, 1.442695
        %v1400 = vpow.pop %v1399
        %v1401 = vmul.f32 %v1363, 1.442695
        %v1402 = vpow.pop %v1401
        %v1403 = vmul.f32 %v1364, 1.442695
        %v1404 = vpow.pop %v1403
        %v1405 = vmul.f32 %v1365, 1.442695
        %v1406 = vpow.pop %v1405
        %v1407 = vmul.f32 %v1366, 1.442695
        %v1408 = vpow.pop %v1407
        %v1409 = vmul.f32 %v1367, 1.442695
        %v1410 = vpow.pop %v1409
        %v1411 = vmul.f32 %v1368, 1.442695
        %v1412 = vpow.pop %v1411
        %v1413 = vmul.f32 %v1369, 1.442695
        %v1414 = vpow.pop %v1413
        %v1415 = vmul.f32 %v1370, 1.442695
        %v1416 = vpow.pop %v1415
        %v1417 = vmul.f32 %v1371, 1.442695
        %v1418 = vpow.pop %v1417
        %v1419 = vmul.f32 %v1372, 1.442695
        %v1420 = vpow.pop %v1419
        %v1421 = vadd.f32 %v1374, 1.0
        %v1422 = vadd.f32 %v1376, 1.0
        %v1423 = vadd.f32 %v1378, 1.0
        %v1424 = vadd.f32 %v1380, 1.0
        %v1425 = vadd.f32 %v1382, 1.0
        %v1426 = vadd.f32 %v1384, 1.0
        %v1427 = vadd.f32 %v1386, 1.0
        %v1428 = vadd.f32 %v1388, 1.0
        %v1429 = vadd.f32 %v1390, 1.0
        %v1430 = vadd.f32 %v1392, 1.0
        %v1431 = vadd.f32 %v1394, 1.0
        %v1432 = vadd.f32 %v1396, 1.0
        %v1433 = vadd.f32 %v1398, 1.0
        %v1434 = vadd.f32 %v1400, 1.0
        %v1435 = vadd.f32 %v1402, 1.0
        %v1436 = vadd.f32 %v1404, 1.0
        %v1437 = vadd.f32 %v1406, 1.0
        %v1438 = vadd.f32 %v1408, 1.0
        %v1439 = vadd.f32 %v1410, 1.0
        %v1440 = vadd.f32 %v1412, 1.0
        %v1441 = vadd.f32 %v1414, 1.0
        %v1442 = vadd.f32 %v1416, 1.0
        %v1443 = vadd.f32 %v1418, 1.0
        %v1444 = vadd.f32 %v1420, 1.0
        %v1445 = vrcp.pop %v1421
        %v1446 = vrcp.pop %v1422
        %v1447 = vrcp.pop %v1423
        %v1448 = vrcp.pop %v1424
        %v1449 = vrcp.pop %v1425
        %v1450 = vrcp.pop %v1426
        %v1451 = vrcp.pop %v1427
        %v1452 = vrcp.pop %v1428
        %v1453 = vrcp.pop %v1429
        %v1454 = vrcp.pop %v1430
        %v1455 = vrcp.pop %v1431
        %v1456 = vrcp.pop %v1432
        %v1457 = vrcp.pop %v1433
        %v1458 = vrcp.pop %v1434
        %v1459 = vrcp.pop %v1435
        %v1460 = vrcp.pop %v1436
        %v1461 = vrcp.pop %v1437
        %v1462 = vrcp.pop %v1438
        %v1463 = vrcp.pop %v1439
        %v1464 = vrcp.pop %v1440
        %v1465 = vrcp.pop %v1441
        %v1466 = vrcp.pop %v1442
        %v1467 = vrcp.pop %v1443
        %v1468 = vrcp.pop %v1444
        %v1469 = vpack.c.bf16 %v1448, %v1445
        %v1470 = vpack.c.bf16 %v1449, %v1446
        %v1471 = vpack.c.bf16 %v1450, %v1447
        %v1472 = vpack.c.bf16 %v1454, %v1451
        %v1473 = vpack.c.bf16 %v1455, %v1452
        %v1474 = vpack.c.bf16 %v1456, %v1453
        %v1475 = vpack.c.bf16 %v1460, %v1457
        %v1476 = vpack.c.bf16 %v1461, %v1458
        %v1477 = vpack.c.bf16 %v1462, %v1459
        %v1478 = vpack.c.bf16 %v1466, %v1463
        %v1479 = vpack.c.bf16 %v1467, %v1464
        %v1480 = vpack.c.bf16 %v1468, %v1465
        %v1493 = vunpack.c.l.b16 %v1469
        %v1494 = vunpack.c.l.b16 %v1470
        %v1495 = vunpack.c.l.b16 %v1471
        %v1496 = vunpack.c.h.b16 %v1469
        %v1497 = vunpack.c.h.b16 %v1470
        %v1498 = vunpack.c.h.b16 %v1471
        %v1499 = vunpack.c.l.b16 %v1472
        %v1500 = vunpack.c.l.b16 %v1473
        %v1501 = vunpack.c.l.b16 %v1474
        %v1502 = vunpack.c.h.b16 %v1472
        %v1503 = vunpack.c.h.b16 %v1473
        %v1504 = vunpack.c.h.b16 %v1474
        %v1505 = vunpack.c.l.b16 %v1475
        %v1506 = vunpack.c.l.b16 %v1476
        %v1507 = vunpack.c.l.b16 %v1477
        %v1508 = vunpack.c.h.b16 %v1475
        %v1509 = vunpack.c.h.b16 %v1476
        %v1510 = vunpack.c.h.b16 %v1477
        %v1511 = vunpack.c.l.b16 %v1478
        %v1512 = vunpack.c.l.b16 %v1479
        %v1513 = vunpack.c.l.b16 %v1480
        %v1514 = vunpack.c.h.b16 %v1478
        %v1515 = vunpack.c.h.b16 %v1479
        %v1516 = vunpack.c.h.b16 %v1480
        %v1517 = vpack.c.b16 %v1494, %v1493
        %v1518 = vpack.c.b16 %v1495, %v1495
        %v1519 = vpack.c.b16 %v1497, %v1496
        %v1520 = vpack.c.b16 %v1498, %v1498
        %v1521 = vpack.c.b16 %v1500, %v1499
        %v1522 = vpack.c.b16 %v1501, %v1501
        %v1523 = vpack.c.b16 %v1503, %v1502
        %v1524 = vpack.c.b16 %v1504, %v1504
        %v1525 = vpack.c.b16 %v1506, %v1505
        %v1526 = vpack.c.b16 %v1507, %v1507
        %v1527 = vpack.c.b16 %v1509, %v1508
        %v1528 = vpack.c.b16 %v1510, %v1510
        %v1529 = vpack.c.b16 %v1512, %v1511
        %v1530 = vpack.c.b16 %v1513, %v1513
        %v1531 = vpack.c.b16 %v1515, %v1514
        %v1532 = vpack.c.b16 %v1516, %v1516
        %1549 = vst [vmem:[%s225] sm:$0xff] %v1517
        %1550 = vst [vmem:[%s225 + $0x8] sm:$0xf] %v1518
        %1551 = vst [vmem:[%s225 + $0xc] sm:$0xff] %v1519
        %1552 = vst [vmem:[%s225 + $0x14] sm:$0xf] %v1520
        %1553 = vst [vmem:[%s225 + $0x18] sm:$0xff] %v1521
        %1554 = vst [vmem:[%s225 + $0x20] sm:$0xf] %v1522
        %1555 = vst [vmem:[%s225 + $0x24] sm:$0xff] %v1523
        %1556 = vst [vmem:[%s225 + $0x2c] sm:$0xf] %v1524
        %1557 = vst [vmem:[%s225 + $0x30] sm:$0xff] %v1525
        %1558 = vst [vmem:[%s225 + $0x38] sm:$0xf] %v1526
        %1559 = vst [vmem:[%s225 + $0x3c] sm:$0xff] %v1527
        %1560 = vst [vmem:[%s225 + $0x44] sm:$0xf] %v1528
        %1561 = vst [vmem:[%s225 + $0x48] sm:$0xff] %v1529
        %1562 = vst [vmem:[%s225 + $0x50] sm:$0xf] %v1530
        %1563 = vst [vmem:[%s225 + $0x54] sm:$0xff] %v1531
        %1564 = vst [vmem:[%s225 + $0x5c] sm:$0xf] %v1532
        %s1565 = sand.u32 %s96, 1
        %s1566 = scalar_lea.sflag [#allocation4], %s1565
        %s1567 = sand.u32 %s96, 1
        %s1568 = smul.addr %s1567, 96
        %s1569 = scalar_lea.vmem [#allocation7], %s1568
        %s1570 = sand.u32 %s124, 1
        %s1571 = scalar_lea.sflag [#allocation9], %s1570
        %s1572 = sand.u32 %s124, 1
        %s1573 = smul.addr %s1572, 48
        %s1574 = scalar_lea.vmem [#allocation8], %s1573
        // Predicated region
        $region37: #{tpu_custom_call.1} parent=27 // pred_check
          %p1575 = pneg %p106
        $region38: #{tpu_custom_call.1} parent=27 // pred_check_branch
          %1577 = sbr.rel (%p1575) target = $region40
        $region39: #{tpu_custom_call.1} parent=27 // pred_region
          %s1578 = smul.u32 8, %s29
          %s1579 = smul.u32 3, %s30
          %s1581 = ssub.s32 1536, 1536
          %1582 = vsyncadd %s1566, %s1581
          %s1583 = smul.addr %s1578, 3
          %s1584 = sadd.s32 %s1579, %s1583
          %s1585 = smul.addr %s1584, 64
          %s1586 = scalar_lea.hbm %s2, %s1585
          %s1587 = sshll.u32 %s1569, 4
          %s1588 = int_to_ptr.vmem [resolvable:$true] %s1587
          %1593 = dma.vmem_to_hbm [thread:$0]  %s1588, 1536, %s1586, %s1566, 192, 192, 12
        $region40: #{tpu_custom_call.1} parent=27 // pred_fallthru
          _
        // Predicated region
        $region41: #{tpu_custom_call.1} parent=27 // pred_check
          %p1594 = pneg %p134
        $region42: #{tpu_custom_call.1} parent=27 // pred_check_branch
          %1596 = sbr.rel (%p1594) target = $region44
        $region43: #{tpu_custom_call.1} parent=27 // pred_region
          %s1597 = smul.u32 2, %s29
          %s1598 = smul.u32 3, %s30
          %s1600 = ssub.s32 768, 768
          %1601 = vsyncadd %s1571, %s1600
          %s1602 = smul.addr %s1597, 3
          %s1603 = sadd.s32 %s1598, %s1602
          %s1604 = smul.addr %s1603, 128
          %s1605 = scalar_lea.hbm %s3, %s1604
          %s1606 = sshll.u32 %s1574, 4
          %s1607 = int_to_ptr.vmem [resolvable:$true] %s1606
          %1612 = dma.vmem_to_hbm [thread:$0]  %s1607, 768, %s1605, %s1571, 384, 384, 24
        $region44: #{tpu_custom_call.1} parent=27 // pred_fallthru
          _
      $region28: #{tpu_custom_call.1} parent=5 // pred_fallthru
        _
      %p1613 = scmp.le.s32.totalorder 2, %s20
      // Predicated region
      $region45: #{tpu_custom_call.1} parent=5 // pred_check
        %p1614 = pneg %p1613
      $region46: #{tpu_custom_call.1} parent=5 // pred_check_branch
        %1616 = sbr.rel (%p1614) target = $region48
      $region47: #{tpu_custom_call.1} parent=5 // pred_region
        %s1617 = ssub.s32 %s20, 2
        // Predicated region
        $region49: #{tpu_custom_call.1} parent=47 // pred_check
          %p1618 = pneg %p112
        $region50: #{tpu_custom_call.1} parent=47 // pred_check_branch
          %1620 = sbr.rel (%p1618) target = $region52
        $region51: #{tpu_custom_call.1} parent=47 // pred_region
          %s1621 = sand.u32 %s97, 1
          %s1622 = scalar_lea.sflag [#allocation4], %s1621
          %s1623 = sand.u32 %s97, 1
          %s1624 = smul.addr %s1623, 96
          %s1625 = scalar_lea.vmem [#allocation7], %s1624
          %1626 = dma.done %s1622, 1536
        $region52: #{tpu_custom_call.1} parent=47 // pred_fallthru
          _
        // Predicated region
        $region53: #{tpu_custom_call.1} parent=47 // pred_check
          %p1627 = pneg %p140
        $region54: #{tpu_custom_call.1} parent=47 // pred_check_branch
          %1629 = sbr.rel (%p1627) target = $region56
        $region55: #{tpu_custom_call.1} parent=47 // pred_region
          %s1630 = sand.u32 %s125, 1
          %s1631 = scalar_lea.sflag [#allocation9], %s1630
          %s1632 = sand.u32 %s125, 1
          %s1633 = smul.addr %s1632, 48
          %s1634 = scalar_lea.vmem [#allocation8], %s1633
          %1635 = dma.done %s1631, 768
        $region56: #{tpu_custom_call.1} parent=47 // pred_fallthru
          _
      $region48: #{tpu_custom_call.1} parent=5 // pred_fallthru
        _
    $region6: #{tpu_custom_call.1} parent=1 // loop_footer
      %s24 = sadd.s32 1, %s20
    $region7: #{tpu_custom_call.1} parent=1 // loop_footer_branch
      %19 = sbr.rel target = $region3
    $region8: #{tpu_custom_call.1} parent=1 // loop_exit
      _
    %1636 = vsyncpa [#allocation3], 1
    %s1637 = scalar_lea.sflag [#allocation3], 1
    %1638 = vsyncpa %s1637, 1
    %1639 = vsyncpa [#allocation4], 1
    %s1640 = scalar_lea.sflag [#allocation4], 1
    %1641 = vsyncpa %s1640, 1
    %1642 = vsyncpa [#allocation9], 1
    %s1643 = scalar_lea.sflag [#allocation9], 1
    %1644 = vsyncpa %s1643, 1
    %1645 = vsyncpa [#allocation5], 1
    %s1646 = scalar_lea.sflag [#allocation5], 1
    %1647 = vsyncpa %s1646, 1

</llo_original>
